<compile_context>
chip_gen: v6e
topology: v6e:2x2x1
jax: 0.10.0
libtpu: 0.0.40
codegen_flags: <defaults>
</compile_context>

<pallas_src>
import functools
import math

import jax
import jax.numpy as jnp
from jax.experimental import pallas as pl
from jax.experimental.pallas import tpu as pltpu


_LANE = 512                        # lane-dense tile width (multiple of 128)
_SQRT2 = 1.4142135623730951
_INV_2P22 = 1.0 / 4194304.0        # 2**-22
_X_SHIFT = 1.0 / 8388608.0 - 1.0   # 2**-23 - 1 (exactly representable in f32)

# Giles (2010) single-precision erfinv polynomial coefficients.
_ERFINV_CENTRAL = (2.81022636e-08, 3.43273939e-07, -3.5233877e-06,
                   -4.39150654e-06, 0.00021858087, -0.00125372503,
                   -0.00417768164, 0.246640727, 1.50140941)
_ERFINV_TAIL = (-0.000200214257, 0.000100950558, 0.00134934322,
                -0.00367342844, 0.00573950773, -0.0076224613,
                0.00943887047, 1.00167406, 2.83297682)


def _cdiv(a, b):
    return (a + b - 1) // b


def _round_up(x, m):
    return ((x + m - 1) // m) * m


def _erfinv_f32(x):
    """Giles' single-precision erfinv: only mul/add + one log + one sqrt."""
    # |x| <= 1 - 2**-23 by construction, so (1-x)(1+x) >= ~2.4e-7 and log is finite.
    w = -jnp.log((1.0 - x) * (1.0 + x))
    wc = w - 2.5
    pc = jnp.float32(_ERFINV_CENTRAL[0])
    for c in _ERFINV_CENTRAL[1:]:
        pc = pc * wc + c
    wt = jnp.sqrt(w) - 3.0
    pt = jnp.float32(_ERFINV_TAIL[0])
    for c in _ERFINV_TAIL[1:]:
        pt = pt * wt + c
    return jnp.where(w < 5.0, pc, pt) * x


def _bits_to_normal(bits):
    """int32/uint32 random bits -> standard-normal f32 samples."""
    mant = jnp.bitwise_and(bits, 0x7FFFFF).astype(jnp.int32).astype(jnp.float32)
    x = mant * _INV_2P22 + _X_SHIFT            # uniform in (-1, 1), |x| <= 1 - 2**-23
    return _SQRT2 * _erfinv_f32(x)


def _reparam_tile(mean_ref, logstd_ref, zs_ref, eps_ref, k, draw_bits):
    mean = mean_ref[...].astype(jnp.float32)
    std = jnp.exp(0.5 * logstd_ref[...].astype(jnp.float32))   # once per tile, reused k times
    for i in range(k):                                         # k small & static -> unrolled
        e = _bits_to_normal(draw_bits(i))
        eps_ref[i] = e.astype(eps_ref.dtype)
        zs_ref[i] = (mean + std * e).astype(zs_ref.dtype)


def _kernel_onchip_prng(seed_ref, mean_ref, logstd_ref, zs_ref, eps_ref, *, k):
    # Distinct, grid-order-independent PRNG stream per tile (megacore-safe).
    pltpu.prng_seed(seed_ref[0], pl.program_id(0))
    shape = mean_ref.shape
    _reparam_tile(mean_ref, logstd_ref, zs_ref, eps_ref, k,
                  lambda i: pltpu.prng_random_bits(shape))


def _kernel_external_bits(bits_ref, mean_ref, logstd_ref, zs_ref, eps_ref, *, k):
    _reparam_tile(mean_ref, logstd_ref, zs_ref, eps_ref, k,
                  lambda i: bits_ref[i])


def reparametrize_iw(z_mean, z_logstd, seed, *, k=5,
                     vmem_budget_bytes=16 * 1024 * 1024, min_grid_steps=8):
    """Pallas TPU implementation of Reparametrize_IW.forward.

    Returns (zs, epss), each a (k, *z_mean.shape) array with
    zs[i] = z_mean + exp(0.5 * z_logstd) * epss[i].
    """
    assert z_mean.shape == z_logstd.shape, (z_mean.shape, z_logstd.shape)
    orig_shape = z_mean.shape
    out_dtype = z_mean.dtype
    n = math.prod(orig_shape) if orig_shape else 1

    use_onchip_prng = jax.default_backend() == "tpu"

    # --- flatten + lane-dense tiling (no per-row feature padding) ------------
    rows = _cdiv(n, _LANE)
    in_bytes = jnp.dtype(z_mean.dtype).itemsize
    out_bytes = jnp.dtype(out_dtype).itemsize
    # double-buffered bytes per element per grid step
    per_elem = 2 * (2 * in_bytes + 2 * k * out_bytes
                    + (0 if use_onchip_prng else 4 * k))
    bm = (vmem_budget_bytes // (per_elem * _LANE)) // 8 * 8
    bm = min(bm, _round_up(_cdiv(rows, min_grid_steps), 8))  # keep >= ~8 grid steps (v7x 2 TCs)
    bm = max(8, min(bm, _round_up(rows, 8)))
    rows_pad = _round_up(rows, bm)
    n_pad = rows_pad * _LANE

    xm = jnp.ravel(z_mean)
    xl = jnp.ravel(z_logstd)
    if n_pad != n:
        xm = jnp.pad(xm, (0, n_pad - n))
        xl = jnp.pad(xl, (0, n_pad - n))
    xm = xm.reshape(rows_pad, _LANE)
    xl = xl.reshape(rows_pad, _LANE)

    grid = (rows_pad // bm,)
    out_shape = (jax.ShapeDtypeStruct((k, rows_pad, _LANE), out_dtype),   # zs
                 jax.ShapeDtypeStruct((k, rows_pad, _LANE), out_dtype))   # epss
    cparams = pltpu.CompilerParams(dimension_semantics=("parallel",))

    if use_onchip_prng:
        seed_arr = jnp.reshape(jnp.asarray(seed, jnp.int32), (1,))
        zs_all, eps_all = pl.pallas_call(
            functools.partial(_kernel_onchip_prng, k=k),
            out_shape=out_shape,
            grid_spec=pltpu.PrefetchScalarGridSpec(
                num_scalar_prefetch=1,
                grid=grid,
                in_specs=[
                    pl.BlockSpec((bm, _LANE), lambda i, s: (i, 0)),
                    pl.BlockSpec((bm, _LANE), lambda i, s: (i, 0)),
                ],
                out_specs=[
                    pl.BlockSpec((k, bm, _LANE), lambda i, s: (0, i, 0)),
                    pl.BlockSpec((k, bm, _LANE), lambda i, s: (0, i, 0)),
                ],
            ),
            compiler_params=cparams,
        )(seed_arr, xm, xl)
    else:
        # Portable fallback (CPU backend / interpreter): TPU PRNG primitives
        # have no lowering there, so raw bits are drawn outside the kernel.
        bits = jax.random.bits(jax.random.PRNGKey(seed),
                               (k, rows_pad, _LANE), dtype=jnp.uint32)
        zs_all, eps_all = pl.pallas_call(
            functools.partial(_kernel_external_bits, k=k),
            out_shape=out_shape,
            grid=grid,
            in_specs=[
                pl.BlockSpec((k, bm, _LANE), lambda i: (0, i, 0)),
                pl.BlockSpec((bm, _LANE), lambda i: (i, 0)),
                pl.BlockSpec((bm, _LANE), lambda i: (i, 0)),
            ],
            out_specs=[
                pl.BlockSpec((k, bm, _LANE), lambda i: (0, i, 0)),
                pl.BlockSpec((k, bm, _LANE), lambda i: (0, i, 0)),
            ],
            compiler_params=cparams,
        )(bits, xm, xl)

    zs_all = zs_all.reshape(k, n_pad)
    eps_all = eps_all.reshape(k, n_pad)
    if n_pad != n:
        zs_all = zs_all[:, :n]
        eps_all = eps_all[:, :n]
    zs = zs_all.reshape((k,) + orig_shape)
    epss = eps_all.reshape((k,) + orig_shape)
    return zs, epss


# -----------------------------------------------------------------------------
# Demo / self-check
# -----------------------------------------------------------------------------
if __name__ == "__main__":
    key = jax.random.PRNGKey(0)
    k_mean, k_logstd = jax.random.split(key)

    B, D = 64, 50        # latent batch x latent dim (D deliberately not /128)
    K = 5                # module default number of importance-weighted samples

    z_mean = jax.random.normal(k_mean, (B, D), jnp.float32)
    z_logstd = -1.0 + 0.25 * jax.random.normal(k_logstd, (B, D), jnp.float32)

    run = jax.jit(functools.partial(reparametrize_iw, k=K))
    zs, epss = run(z_mean, z_logstd, jnp.int32(1234))
    jax.block_until_ready(zs)
    jax.block_until_ready(epss)

    assert zs.shape == (K, B, D) and epss.shape == (K, B, D)
    assert bool(jnp.all(jnp.isfinite(zs))) and bool(jnp.all(jnp.isfinite(epss)))

    # zs must be exactly the reparameterization of the returned noise.
    z_std = jnp.exp(0.5 * z_logstd)
    err = float(jnp.max(jnp.abs(zs - (z_mean[None] + z_std[None] * epss))))
    assert err < 1e-5, err

    # Noise should look standard-normal and differ across the k samples.
    assert abs(float(jnp.mean(epss))) < 0.1
    assert abs(float(jnp.std(epss)) - 1.0) < 0.1
    assert float(jnp.max(jnp.abs(epss[0] - epss[1]))) > 1e-3

    print("KERNEL_OK")
</pallas_src>

<mosaic_0001>
module attributes {stable_mosaic.version = 11 : i64} {
  func.func @_kernel_external_bits(%arg0: i32, %arg1: memref<5x8x512xi32, #tpu.memory_space<vmem>>, %arg2: memref<8x512xf32, #tpu.memory_space<vmem>>, %arg3: memref<8x512xf32, #tpu.memory_space<vmem>>, %arg4: memref<5x8x512xf32, #tpu.memory_space<vmem>>, %arg5: memref<5x8x512xf32, #tpu.memory_space<vmem>>) attributes {dimension_semantics = [#tpu.dimension_semantics<parallel>], iteration_bounds = array<i64: 1>, scalar_prefetch = 0 : i64, scratch_operands = 0 : i64, tpu.core_type = #tpu.core_type<tc>, window_params = [{transform_indices = @transform_0, window_bounds = array<i64: 5, 8, 512>}, {transform_indices = @transform_1, window_bounds = array<i64: 8, 512>}, {transform_indices = @transform_2, window_bounds = array<i64: 8, 512>}, {transform_indices = @transform_3, window_bounds = array<i64: 5, 8, 512>}, {transform_indices = @transform_4, window_bounds = array<i64: 5, 8, 512>}]} {
    %c0 = arith.constant 0 : index
    %c0_0 = arith.constant 0 : index
    %0 = vector.load %arg2[%c0, %c0_0] : memref<8x512xf32, #tpu.memory_space<vmem>>, vector<8x512xf32>
    %c0_1 = arith.constant 0 : index
    %c0_2 = arith.constant 0 : index
    %1 = vector.load %arg3[%c0_1, %c0_2] : memref<8x512xf32, #tpu.memory_space<vmem>>, vector<8x512xf32>
    %cst = arith.constant 5.000000e-01 : f32
    %2 = vector.broadcast %cst : f32 to vector<8x512xf32>
    %3 = arith.mulf %2, %1 : vector<8x512xf32>
    %4 = math.exp %3 : vector<8x512xf32>
    %c0_3 = arith.constant 0 : index
    %c0_4 = arith.constant 0 : index
    %c0_5 = arith.constant 0 : index
    %5 = vector.load %arg1[%c0_3, %c0_4, %c0_5] : memref<5x8x512xi32, #tpu.memory_space<vmem>>, vector<1x8x512xi32>
    %6 = vector.shape_cast %5 : vector<1x8x512xi32> to vector<8x512xi32>
    %c8388607_i32 = arith.constant 8388607 : i32
    %7 = vector.broadcast %c8388607_i32 : i32 to vector<8x512xi32>
    %8 = arith.andi %6, %7 : vector<8x512xi32>
    %9 = arith.sitofp %8 : vector<8x512xi32> to vector<8x512xf32>
    %cst_6 = arith.constant 2.38418579E-7 : f32
    %10 = vector.broadcast %cst_6 : f32 to vector<8x512xf32>
    %11 = arith.mulf %9, %10 : vector<8x512xf32>
    %cst_7 = arith.constant -0.99999988 : f32
    %12 = vector.broadcast %cst_7 : f32 to vector<8x512xf32>
    %13 = arith.addf %11, %12 : vector<8x512xf32>
    %cst_8 = arith.constant 1.000000e+00 : f32
    %14 = vector.broadcast %cst_8 : f32 to vector<8x512xf32>
    %15 = arith.subf %14, %13 : vector<8x512xf32>
    %cst_9 = arith.constant 1.000000e+00 : f32
    %16 = vector.broadcast %cst_9 : f32 to vector<8x512xf32>
    %17 = arith.addf %16, %13 : vector<8x512xf32>
    %18 = arith.mulf %15, %17 : vector<8x512xf32>
    %19 = math.log %18 : vector<8x512xf32>
    %cst_10 = arith.constant 0.000000e+00 : f32
    %20 = vector.broadcast %cst_10 : f32 to vector<8x512xf32>
    %21 = arith.subf %20, %19 : vector<8x512xf32>
    %cst_11 = arith.constant 2.500000e+00 : f32
    %22 = vector.broadcast %cst_11 : f32 to vector<8x512xf32>
    %23 = arith.subf %21, %22 : vector<8x512xf32>
    %cst_12 = arith.constant 2.81022636E-8 : f32
    %24 = vector.broadcast %cst_12 : f32 to vector<8x512xf32>
    %25 = arith.mulf %24, %23 : vector<8x512xf32>
    %cst_13 = arith.constant 3.43273939E-7 : f32
    %26 = vector.broadcast %cst_13 : f32 to vector<8x512xf32>
    %27 = arith.addf %25, %26 : vector<8x512xf32>
    %28 = arith.mulf %27, %23 : vector<8x512xf32>
    %cst_14 = arith.constant -3.5233877E-6 : f32
    %29 = vector.broadcast %cst_14 : f32 to vector<8x512xf32>
    %30 = arith.addf %28, %29 : vector<8x512xf32>
    %31 = arith.mulf %30, %23 : vector<8x512xf32>
    %cst_15 = arith.constant -4.39150654E-6 : f32
    %32 = vector.broadcast %cst_15 : f32 to vector<8x512xf32>
    %33 = arith.addf %31, %32 : vector<8x512xf32>
    %34 = arith.mulf %33, %23 : vector<8x512xf32>
    %cst_16 = arith.constant 2.1858087E-4 : f32
    %35 = vector.broadcast %cst_16 : f32 to vector<8x512xf32>
    %36 = arith.addf %34, %35 : vector<8x512xf32>
    %37 = arith.mulf %36, %23 : vector<8x512xf32>
    %cst_17 = arith.constant -0.00125372503 : f32
    %38 = vector.broadcast %cst_17 : f32 to vector<8x512xf32>
    %39 = arith.addf %37, %38 : vector<8x512xf32>
    %40 = arith.mulf %39, %23 : vector<8x512xf32>
    %cst_18 = arith.constant -0.00417768164 : f32
    %41 = vector.broadcast %cst_18 : f32 to vector<8x512xf32>
    %42 = arith.addf %40, %41 : vector<8x512xf32>
    %43 = arith.mulf %42, %23 : vector<8x512xf32>
    %cst_19 = arith.constant 0.246640727 : f32
    %44 = vector.broadcast %cst_19 : f32 to vector<8x512xf32>
    %45 = arith.addf %43, %44 : vector<8x512xf32>
    %46 = arith.mulf %45, %23 : vector<8x512xf32>
    %cst_20 = arith.constant 1.50140941 : f32
    %47 = vector.broadcast %cst_20 : f32 to vector<8x512xf32>
    %48 = arith.addf %46, %47 : vector<8x512xf32>
    %49 = math.sqrt %21 : vector<8x512xf32>
    %cst_21 = arith.constant 3.000000e+00 : f32
    %50 = vector.broadcast %cst_21 : f32 to vector<8x512xf32>
    %51 = arith.subf %49, %50 : vector<8x512xf32>
    %cst_22 = arith.constant -2.00214257E-4 : f32
    %52 = vector.broadcast %cst_22 : f32 to vector<8x512xf32>
    %53 = arith.mulf %52, %51 : vector<8x512xf32>
    %cst_23 = arith.constant 1.00950558E-4 : f32
    %54 = vector.broadcast %cst_23 : f32 to vector<8x512xf32>
    %55 = arith.addf %53, %54 : vector<8x512xf32>
    %56 = arith.mulf %55, %51 : vector<8x512xf32>
    %cst_24 = arith.constant 0.00134934322 : f32
    %57 = vector.broadcast %cst_24 : f32 to vector<8x512xf32>
    %58 = arith.addf %56, %57 : vector<8x512xf32>
    %59 = arith.mulf %58, %51 : vector<8x512xf32>
    %cst_25 = arith.constant -0.00367342844 : f32
    %60 = vector.broadcast %cst_25 : f32 to vector<8x512xf32>
    %61 = arith.addf %59, %60 : vector<8x512xf32>
    %62 = arith.mulf %61, %51 : vector<8x512xf32>
    %cst_26 = arith.constant 0.00573950773 : f32
    %63 = vector.broadcast %cst_26 : f32 to vector<8x512xf32>
    %64 = arith.addf %62, %63 : vector<8x512xf32>
    %65 = arith.mulf %64, %51 : vector<8x512xf32>
    %cst_27 = arith.constant -0.0076224613 : f32
    %66 = vector.broadcast %cst_27 : f32 to vector<8x512xf32>
    %67 = arith.addf %65, %66 : vector<8x512xf32>
    %68 = arith.mulf %67, %51 : vector<8x512xf32>
    %cst_28 = arith.constant 0.00943887047 : f32
    %69 = vector.broadcast %cst_28 : f32 to vector<8x512xf32>
    %70 = arith.addf %68, %69 : vector<8x512xf32>
    %71 = arith.mulf %70, %51 : vector<8x512xf32>
    %cst_29 = arith.constant 1.00167406 : f32
    %72 = vector.broadcast %cst_29 : f32 to vector<8x512xf32>
    %73 = arith.addf %71, %72 : vector<8x512xf32>
    %74 = arith.mulf %73, %51 : vector<8x512xf32>
    %cst_30 = arith.constant 2.83297682 : f32
    %75 = vector.broadcast %cst_30 : f32 to vector<8x512xf32>
    %76 = arith.addf %74, %75 : vector<8x512xf32>
    %cst_31 = arith.constant 5.000000e+00 : f32
    %77 = vector.broadcast %cst_31 : f32 to vector<8x512xf32>
    %78 = arith.cmpf olt, %21, %77 : vector<8x512xf32>
    %79 = arith.select %78, %48, %76 : vector<8x512xi1>, vector<8x512xf32>
    %80 = arith.mulf %79, %13 : vector<8x512xf32>
    %cst_32 = arith.constant 1.41421354 : f32
    %81 = vector.broadcast %cst_32 : f32 to vector<8x512xf32>
    %82 = arith.mulf %81, %80 : vector<8x512xf32>
    %c0_33 = arith.constant 0 : index
    %c0_34 = arith.constant 0 : index
    %c0_35 = arith.constant 0 : index
    %83 = vector.load %arg5[%c0_33, %c0_34, %c0_35] : memref<5x8x512xf32, #tpu.memory_space<vmem>>, vector<1x8x512xf32>
    %84 = vector.shape_cast %83 : vector<1x8x512xf32> to vector<8x512xf32>
    %85 = vector.shape_cast %82 : vector<8x512xf32> to vector<1x8x512xf32>
    tpu.vector_store %arg5[%c0_33, %c0_34, %c0_35], %85 {strides = array<i32>} : memref<5x8x512xf32, #tpu.memory_space<vmem>>, vector<1x8x512xf32>,
    %86 = arith.mulf %4, %82 : vector<8x512xf32>
    %87 = arith.addf %0, %86 : vector<8x512xf32>
    %c0_36 = arith.constant 0 : index
    %c0_37 = arith.constant 0 : index
    %c0_38 = arith.constant 0 : index
    %88 = vector.load %arg4[%c0_36, %c0_37, %c0_38] : memref<5x8x512xf32, #tpu.memory_space<vmem>>, vector<1x8x512xf32>
    %89 = vector.shape_cast %88 : vector<1x8x512xf32> to vector<8x512xf32>
    %90 = vector.shape_cast %87 : vector<8x512xf32> to vector<1x8x512xf32>
    tpu.vector_store %arg4[%c0_36, %c0_37, %c0_38], %90 {strides = array<i32>} : memref<5x8x512xf32, #tpu.memory_space<vmem>>, vector<1x8x512xf32>,
    %c1 = arith.constant 1 : index
    %c0_39 = arith.constant 0 : index
    %c0_40 = arith.constant 0 : index
    %91 = vector.load %arg1[%c1, %c0_39, %c0_40] : memref<5x8x512xi32, #tpu.memory_space<vmem>>, vector<1x8x512xi32>
    %92 = vector.shape_cast %91 : vector<1x8x512xi32> to vector<8x512xi32>
    %c8388607_i32_41 = arith.constant 8388607 : i32
    %93 = vector.broadcast %c8388607_i32_41 : i32 to vector<8x512xi32>
    %94 = arith.andi %92, %93 : vector<8x512xi32>
    %95 = arith.sitofp %94 : vector<8x512xi32> to vector<8x512xf32>
    %cst_42 = arith.constant 2.38418579E-7 : f32
    %96 = vector.broadcast %cst_42 : f32 to vector<8x512xf32>
    %97 = arith.mulf %95, %96 : vector<8x512xf32>
    %cst_43 = arith.constant -0.99999988 : f32
    %98 = vector.broadcast %cst_43 : f32 to vector<8x512xf32>
    %99 = arith.addf %97, %98 : vector<8x512xf32>
    %cst_44 = arith.constant 1.000000e+00 : f32
    %100 = vector.broadcast %cst_44 : f32 to vector<8x512xf32>
    %101 = arith.subf %100, %99 : vector<8x512xf32>
    %cst_45 = arith.constant 1.000000e+00 : f32
    %102 = vector.broadcast %cst_45 : f32 to vector<8x512xf32>
    %103 = arith.addf %102, %99 : vector<8x512xf32>
    %104 = arith.mulf %101, %103 : vector<8x512xf32>
    %105 = math.log %104 : vector<8x512xf32>
    %cst_46 = arith.constant 0.000000e+00 : f32
    %106 = vector.broadcast %cst_46 : f32 to vector<8x512xf32>
    %107 = arith.subf %106, %105 : vector<8x512xf32>
    %cst_47 = arith.constant 2.500000e+00 : f32
    %108 = vector.broadcast %cst_47 : f32 to vector<8x512xf32>
    %109 = arith.subf %107, %108 : vector<8x512xf32>
    %cst_48 = arith.constant 2.81022636E-8 : f32
    %110 = vector.broadcast %cst_48 : f32 to vector<8x512xf32>
    %111 = arith.mulf %110, %109 : vector<8x512xf32>
    %cst_49 = arith.constant 3.43273939E-7 : f32
    %112 = vector.broadcast %cst_49 : f32 to vector<8x512xf32>
    %113 = arith.addf %111, %112 : vector<8x512xf32>
    %114 = arith.mulf %113, %109 : vector<8x512xf32>
    %cst_50 = arith.constant -3.5233877E-6 : f32
    %115 = vector.broadcast %cst_50 : f32 to vector<8x512xf32>
    %116 = arith.addf %114, %115 : vector<8x512xf32>
    %117 = arith.mulf %116, %109 : vector<8x512xf32>
    %cst_51 = arith.constant -4.39150654E-6 : f32
    %118 = vector.broadcast %cst_51 : f32 to vector<8x512xf32>
    %119 = arith.addf %117, %118 : vector<8x512xf32>
    %120 = arith.mulf %119, %109 : vector<8x512xf32>
    %cst_52 = arith.constant 2.1858087E-4 : f32
    %121 = vector.broadcast %cst_52 : f32 to vector<8x512xf32>
    %122 = arith.addf %120, %121 : vector<8x512xf32>
    %123 = arith.mulf %122, %109 : vector<8x512xf32>
    %cst_53 = arith.constant -0.00125372503 : f32
    %124 = vector.broadcast %cst_53 : f32 to vector<8x512xf32>
    %125 = arith.addf %123, %124 : vector<8x512xf32>
    %126 = arith.mulf %125, %109 : vector<8x512xf32>
    %cst_54 = arith.constant -0.00417768164 : f32
    %127 = vector.broadcast %cst_54 : f32 to vector<8x512xf32>
    %128 = arith.addf %126, %127 : vector<8x512xf32>
    %129 = arith.mulf %128, %109 : vector<8x512xf32>
    %cst_55 = arith.constant 0.246640727 : f32
    %130 = vector.broadcast %cst_55 : f32 to vector<8x512xf32>
    %131 = arith.addf %129, %130 : vector<8x512xf32>
    %132 = arith.mulf %131, %109 : vector<8x512xf32>
    %cst_56 = arith.constant 1.50140941 : f32
    %133 = vector.broadcast %cst_56 : f32 to vector<8x512xf32>
    %134 = arith.addf %132, %133 : vector<8x512xf32>
    %135 = math.sqrt %107 : vector<8x512xf32>
    %cst_57 = arith.constant 3.000000e+00 : f32
    %136 = vector.broadcast %cst_57 : f32 to vector<8x512xf32>
    %137 = arith.subf %135, %136 : vector<8x512xf32>
    %cst_58 = arith.constant -2.00214257E-4 : f32
    %138 = vector.broadcast %cst_58 : f32 to vector<8x512xf32>
    %139 = arith.mulf %138, %137 : vector<8x512xf32>
    %cst_59 = arith.constant 1.00950558E-4 : f32
    %140 = vector.broadcast %cst_59 : f32 to vector<8x512xf32>
    %141 = arith.addf %139, %140 : vector<8x512xf32>
    %142 = arith.mulf %141, %137 : vector<8x512xf32>
    %cst_60 = arith.constant 0.00134934322 : f32
    %143 = vector.broadcast %cst_60 : f32 to vector<8x512xf32>
    %144 = arith.addf %142, %143 : vector<8x512xf32>
    %145 = arith.mulf %144, %137 : vector<8x512xf32>
    %cst_61 = arith.constant -0.00367342844 : f32
    %146 = vector.broadcast %cst_61 : f32 to vector<8x512xf32>
    %147 = arith.addf %145, %146 : vector<8x512xf32>
    %148 = arith.mulf %147, %137 : vector<8x512xf32>
    %cst_62 = arith.constant 0.00573950773 : f32
    %149 = vector.broadcast %cst_62 : f32 to vector<8x512xf32>
    %150 = arith.addf %148, %149 : vector<8x512xf32>
    %151 = arith.mulf %150, %137 : vector<8x512xf32>
    %cst_63 = arith.constant -0.0076224613 : f32
    %152 = vector.broadcast %cst_63 : f32 to vector<8x512xf32>
    %153 = arith.addf %151, %152 : vector<8x512xf32>
    %154 = arith.mulf %153, %137 : vector<8x512xf32>
    %cst_64 = arith.constant 0.00943887047 : f32
    %155 = vector.broadcast %cst_64 : f32 to vector<8x512xf32>
    %156 = arith.addf %154, %155 : vector<8x512xf32>
    %157 = arith.mulf %156, %137 : vector<8x512xf32>
    %cst_65 = arith.constant 1.00167406 : f32
    %158 = vector.broadcast %cst_65 : f32 to vector<8x512xf32>
    %159 = arith.addf %157, %158 : vector<8x512xf32>
    %160 = arith.mulf %159, %137 : vector<8x512xf32>
    %cst_66 = arith.constant 2.83297682 : f32
    %161 = vector.broadcast %cst_66 : f32 to vector<8x512xf32>
    %162 = arith.addf %160, %161 : vector<8x512xf32>
    %cst_67 = arith.constant 5.000000e+00 : f32
    %163 = vector.broadcast %cst_67 : f32 to vector<8x512xf32>
    %164 = arith.cmpf olt, %107, %163 : vector<8x512xf32>
    %165 = arith.select %164, %134, %162 : vector<8x512xi1>, vector<8x512xf32>
    %166 = arith.mulf %165, %99 : vector<8x512xf32>
    %cst_68 = arith.constant 1.41421354 : f32
    %167 = vector.broadcast %cst_68 : f32 to vector<8x512xf32>
    %168 = arith.mulf %167, %166 : vector<8x512xf32>
    %c1_69 = arith.constant 1 : index
    %c0_70 = arith.constant 0 : index
    %c0_71 = arith.constant 0 : index
    %169 = vector.load %arg5[%c1_69, %c0_70, %c0_71] : memref<5x8x512xf32, #tpu.memory_space<vmem>>, vector<1x8x512xf32>
    %170 = vector.shape_cast %169 : vector<1x8x512xf32> to vector<8x512xf32>
    %171 = vector.shape_cast %168 : vector<8x512xf32> to vector<1x8x512xf32>
    tpu.vector_store %arg5[%c1_69, %c0_70, %c0_71], %171 {strides = array<i32>} : memref<5x8x512xf32, #tpu.memory_space<vmem>>, vector<1x8x512xf32>,
    %172 = arith.mulf %4, %168 : vector<8x512xf32>
    %173 = arith.addf %0, %172 : vector<8x512xf32>
    %c1_72 = arith.constant 1 : index
    %c0_73 = arith.constant 0 : index
    %c0_74 = arith.constant 0 : index
    %174 = vector.load %arg4[%c1_72, %c0_73, %c0_74] : memref<5x8x512xf32, #tpu.memory_space<vmem>>, vector<1x8x512xf32>
    %175 = vector.shape_cast %174 : vector<1x8x512xf32> to vector<8x512xf32>
    %176 = vector.shape_cast %173 : vector<8x512xf32> to vector<1x8x512xf32>
    tpu.vector_store %arg4[%c1_72, %c0_73, %c0_74], %176 {strides = array<i32>} : memref<5x8x512xf32, #tpu.memory_space<vmem>>, vector<1x8x512xf32>,
    %c2 = arith.constant 2 : index
    %c0_75 = arith.constant 0 : index
    %c0_76 = arith.constant 0 : index
    %177 = vector.load %arg1[%c2, %c0_75, %c0_76] : memref<5x8x512xi32, #tpu.memory_space<vmem>>, vector<1x8x512xi32>
    %178 = vector.shape_cast %177 : vector<1x8x512xi32> to vector<8x512xi32>
    %c8388607_i32_77 = arith.constant 8388607 : i32
    %179 = vector.broadcast %c8388607_i32_77 : i32 to vector<8x512xi32>
    %180 = arith.andi %178, %179 : vector<8x512xi32>
    %181 = arith.sitofp %180 : vector<8x512xi32> to vector<8x512xf32>
    %cst_78 = arith.constant 2.38418579E-7 : f32
    %182 = vector.broadcast %cst_78 : f32 to vector<8x512xf32>
    %183 = arith.mulf %181, %182 : vector<8x512xf32>
    %cst_79 = arith.constant -0.99999988 : f32
    %184 = vector.broadcast %cst_79 : f32 to vector<8x512xf32>
    %185 = arith.addf %183, %184 : vector<8x512xf32>
    %cst_80 = arith.constant 1.000000e+00 : f32
    %186 = vector.broadcast %cst_80 : f32 to vector<8x512xf32>
    %187 = arith.subf %186, %185 : vector<8x512xf32>
    %cst_81 = arith.constant 1.000000e+00 : f32
    %188 = vector.broadcast %cst_81 : f32 to vector<8x512xf32>
    %189 = arith.addf %188, %185 : vector<8x512xf32>
    %190 = arith.mulf %187, %189 : vector<8x512xf32>
    %191 = math.log %190 : vector<8x512xf32>
    %cst_82 = arith.constant 0.000000e+00 : f32
    %192 = vector.broadcast %cst_82 : f32 to vector<8x512xf32>
    %193 = arith.subf %192, %191 : vector<8x512xf32>
    %cst_83 = arith.constant 2.500000e+00 : f32
    %194 = vector.broadcast %cst_83 : f32 to vector<8x512xf32>
    %195 = arith.subf %193, %194 : vector<8x512xf32>
    %cst_84 = arith.constant 2.81022636E-8 : f32
    %196 = vector.broadcast %cst_84 : f32 to vector<8x512xf32>
    %197 = arith.mulf %196, %195 : vector<8x512xf32>
    %cst_85 = arith.constant 3.43273939E-7 : f32
    %198 = vector.broadcast %cst_85 : f32 to vector<8x512xf32>
    %199 = arith.addf %197, %198 : vector<8x512xf32>
    %200 = arith.mulf %199, %195 : vector<8x512xf32>
    %cst_86 = arith.constant -3.5233877E-6 : f32
    %201 = vector.broadcast %cst_86 : f32 to vector<8x512xf32>
    %202 = arith.addf %200, %201 : vector<8x512xf32>
    %203 = arith.mulf %202, %195 : vector<8x512xf32>
    %cst_87 = arith.constant -4.39150654E-6 : f32
    %204 = vector.broadcast %cst_87 : f32 to vector<8x512xf32>
    %205 = arith.addf %203, %204 : vector<8x512xf32>
    %206 = arith.mulf %205, %195 : vector<8x512xf32>
    %cst_88 = arith.constant 2.1858087E-4 : f32
    %207 = vector.broadcast %cst_88 : f32 to vector<8x512xf32>
    %208 = arith.addf %206, %207 : vector<8x512xf32>
    %209 = arith.mulf %208, %195 : vector<8x512xf32>
    %cst_89 = arith.constant -0.00125372503 : f32
    %210 = vector.broadcast %cst_89 : f32 to vector<8x512xf32>
    %211 = arith.addf %209, %210 : vector<8x512xf32>
    %212 = arith.mulf %211, %195 : vector<8x512xf32>
    %cst_90 = arith.constant -0.00417768164 : f32
    %213 = vector.broadcast %cst_90 : f32 to vector<8x512xf32>
    %214 = arith.addf %212, %213 : vector<8x512xf32>
    %215 = arith.mulf %214, %195 : vector<8x512xf32>
    %cst_91 = arith.constant 0.246640727 : f32
    %216 = vector.broadcast %cst_91 : f32 to vector<8x512xf32>
    %217 = arith.addf %215, %216 : vector<8x512xf32>
    %218 = arith.mulf %217, %195 : vector<8x512xf32>
    %cst_92 = arith.constant 1.50140941 : f32
    %219 = vector.broadcast %cst_92 : f32 to vector<8x512xf32>
    %220 = arith.addf %218, %219 : vector<8x512xf32>
    %221 = math.sqrt %193 : vector<8x512xf32>
    %cst_93 = arith.constant 3.000000e+00 : f32
    %222 = vector.broadcast %cst_93 : f32 to vector<8x512xf32>
    %223 = arith.subf %221, %222 : vector<8x512xf32>
    %cst_94 = arith.constant -2.00214257E-4 : f32
    %224 = vector.broadcast %cst_94 : f32 to vector<8x512xf32>
    %225 = arith.mulf %224, %223 : vector<8x512xf32>
    %cst_95 = arith.constant 1.00950558E-4 : f32
    %226 = vector.broadcast %cst_95 : f32 to vector<8x512xf32>
    %227 = arith.addf %225, %226 : vector<8x512xf32>
    %228 = arith.mulf %227, %223 : vector<8x512xf32>
    %cst_96 = arith.constant 0.00134934322 : f32
    %229 = vector.broadcast %cst_96 : f32 to vector<8x512xf32>
    %230 = arith.addf %228, %229 : vector<8x512xf32>
    %231 = arith.mulf %230, %223 : vector<8x512xf32>
    %cst_97 = arith.constant -0.00367342844 : f32
    %232 = vector.broadcast %cst_97 : f32 to vector<8x512xf32>
    %233 = arith.addf %231, %232 : vector<8x512xf32>
    %234 = arith.mulf %233, %223 : vector<8x512xf32>
    %cst_98 = arith.constant 0.00573950773 : f32
    %235 = vector.broadcast %cst_98 : f32 to vector<8x512xf32>
    %236 = arith.addf %234, %235 : vector<8x512xf32>
    %237 = arith.mulf %236, %223 : vector<8x512xf32>
    %cst_99 = arith.constant -0.0076224613 : f32
    %238 = vector.broadcast %cst_99 : f32 to vector<8x512xf32>
    %239 = arith.addf %237, %238 : vector<8x512xf32>
    %240 = arith.mulf %239, %223 : vector<8x512xf32>
    %cst_100 = arith.constant 0.00943887047 : f32
    %241 = vector.broadcast %cst_100 : f32 to vector<8x512xf32>
    %242 = arith.addf %240, %241 : vector<8x512xf32>
    %243 = arith.mulf %242, %223 : vector<8x512xf32>
    %cst_101 = arith.constant 1.00167406 : f32
    %244 = vector.broadcast %cst_101 : f32 to vector<8x512xf32>
    %245 = arith.addf %243, %244 : vector<8x512xf32>
    %246 = arith.mulf %245, %223 : vector<8x512xf32>
    %cst_102 = arith.constant 2.83297682 : f32
    %247 = vector.broadcast %cst_102 : f32 to vector<8x512xf32>
    %248 = arith.addf %246, %247 : vector<8x512xf32>
    %cst_103 = arith.constant 5.000000e+00 : f32
    %249 = vector.broadcast %cst_103 : f32 to vector<8x512xf32>
    %250 = arith.cmpf olt, %193, %249 : vector<8x512xf32>
    %251 = arith.select %250, %220, %248 : vector<8x512xi1>, vector<8x512xf32>
    %252 = arith.mulf %251, %185 : vector<8x512xf32>
    %cst_104 = arith.constant 1.41421354 : f32
    %253 = vector.broadcast %cst_104 : f32 to vector<8x512xf32>
    %254 = arith.mulf %253, %252 : vector<8x512xf32>
    %c2_105 = arith.constant 2 : index
    %c0_106 = arith.constant 0 : index
    %c0_107 = arith.constant 0 : index
    %255 = vector.load %arg5[%c2_105, %c0_106, %c0_107] : memref<5x8x512xf32, #tpu.memory_space<vmem>>, vector<1x8x512xf32>
    %256 = vector.shape_cast %255 : vector<1x8x512xf32> to vector<8x512xf32>
    %257 = vector.shape_cast %254 : vector<8x512xf32> to vector<1x8x512xf32>
    tpu.vector_store %arg5[%c2_105, %c0_106, %c0_107], %257 {strides = array<i32>} : memref<5x8x512xf32, #tpu.memory_space<vmem>>, vector<1x8x512xf32>,
    %258 = arith.mulf %4, %254 : vector<8x512xf32>
    %259 = arith.addf %0, %258 : vector<8x512xf32>
    %c2_108 = arith.constant 2 : index
    %c0_109 = arith.constant 0 : index
    %c0_110 = arith.constant 0 : index
    %260 = vector.load %arg4[%c2_108, %c0_109, %c0_110] : memref<5x8x512xf32, #tpu.memory_space<vmem>>, vector<1x8x512xf32>
    %261 = vector.shape_cast %260 : vector<1x8x512xf32> to vector<8x512xf32>
    %262 = vector.shape_cast %259 : vector<8x512xf32> to vector<1x8x512xf32>
    tpu.vector_store %arg4[%c2_108, %c0_109, %c0_110], %262 {strides = array<i32>} : memref<5x8x512xf32, #tpu.memory_space<vmem>>, vector<1x8x512xf32>,
    %c3 = arith.constant 3 : index
    %c0_111 = arith.constant 0 : index
    %c0_112 = arith.constant 0 : index
    %263 = vector.load %arg1[%c3, %c0_111, %c0_112] : memref<5x8x512xi32, #tpu.memory_space<vmem>>, vector<1x8x512xi32>
    %264 = vector.shape_cast %263 : vector<1x8x512xi32> to vector<8x512xi32>
    %c8388607_i32_113 = arith.constant 8388607 : i32
    %265 = vector.broadcast %c8388607_i32_113 : i32 to vector<8x512xi32>
    %266 = arith.andi %264, %265 : vector<8x512xi32>
    %267 = arith.sitofp %266 : vector<8x512xi32> to vector<8x512xf32>
    %cst_114 = arith.constant 2.38418579E-7 : f32
    %268 = vector.broadcast %cst_114 : f32 to vector<8x512xf32>
    %269 = arith.mulf %267, %268 : vector<8x512xf32>
    %cst_115 = arith.constant -0.99999988 : f32
    %270 = vector.broadcast %cst_115 : f32 to vector<8x512xf32>
    %271 = arith.addf %269, %270 : vector<8x512xf32>
    %cst_116 = arith.constant 1.000000e+00 : f32
    %272 = vector.broadcast %cst_116 : f32 to vector<8x512xf32>
    %273 = arith.subf %272, %271 : vector<8x512xf32>
    %cst_117 = arith.constant 1.000000e+00 : f32
    %274 = vector.broadcast %cst_117 : f32 to vector<8x512xf32>
    %275 = arith.addf %274, %271 : vector<8x512xf32>
    %276 = arith.mulf %273, %275 : vector<8x512xf32>
    %277 = math.log %276 : vector<8x512xf32>
    %cst_118 = arith.constant 0.000000e+00 : f32
    %278 = vector.broadcast %cst_118 : f32 to vector<8x512xf32>
    %279 = arith.subf %278, %277 : vector<8x512xf32>
    %cst_119 = arith.constant 2.500000e+00 : f32
    %280 = vector.broadcast %cst_119 : f32 to vector<8x512xf32>
    %281 = arith.subf %279, %280 : vector<8x512xf32>
    %cst_120 = arith.constant 2.81022636E-8 : f32
    %282 = vector.broadcast %cst_120 : f32 to vector<8x512xf32>
    %283 = arith.mulf %282, %281 : vector<8x512xf32>
    %cst_121 = arith.constant 3.43273939E-7 : f32
    %284 = vector.broadcast %cst_121 : f32 to vector<8x512xf32>
    %285 = arith.addf %283, %284 : vector<8x512xf32>
    %286 = arith.mulf %285, %281 : vector<8x512xf32>
    %cst_122 = arith.constant -3.5233877E-6 : f32
    %287 = vector.broadcast %cst_122 : f32 to vector<8x512xf32>
    %288 = arith.addf %286, %287 : vector<8x512xf32>
    %289 = arith.mulf %288, %281 : vector<8x512xf32>
    %cst_123 = arith.constant -4.39150654E-6 : f32
    %290 = vector.broadcast %cst_123 : f32 to vector<8x512xf32>
    %291 = arith.addf %289, %290 : vector<8x512xf32>
    %292 = arith.mulf %291, %281 : vector<8x512xf32>
    %cst_124 = arith.constant 2.1858087E-4 : f32
    %293 = vector.broadcast %cst_124 : f32 to vector<8x512xf32>
    %294 = arith.addf %292, %293 : vector<8x512xf32>
    %295 = arith.mulf %294, %281 : vector<8x512xf32>
    %cst_125 = arith.constant -0.00125372503 : f32
    %296 = vector.broadcast %cst_125 : f32 to vector<8x512xf32>
    %297 = arith.addf %295, %296 : vector<8x512xf32>
    %298 = arith.mulf %297, %281 : vector<8x512xf32>
    %cst_126 = arith.constant -0.00417768164 : f32
    %299 = vector.broadcast %cst_126 : f32 to vector<8x512xf32>
    %300 = arith.addf %298, %299 : vector<8x512xf32>
    %301 = arith.mulf %300, %281 : vector<8x512xf32>
    %cst_127 = arith.constant 0.246640727 : f32
    %302 = vector.broadcast %cst_127 : f32 to vector<8x512xf32>
    %303 = arith.addf %301, %302 : vector<8x512xf32>
    %304 = arith.mulf %303, %281 : vector<8x512xf32>
    %cst_128 = arith.constant 1.50140941 : f32
    %305 = vector.broadcast %cst_128 : f32 to vector<8x512xf32>
    %306 = arith.addf %304, %305 : vector<8x512xf32>
    %307 = math.sqrt %279 : vector<8x512xf32>
    %cst_129 = arith.constant 3.000000e+00 : f32
    %308 = vector.broadcast %cst_129 : f32 to vector<8x512xf32>
    %309 = arith.subf %307, %308 : vector<8x512xf32>
    %cst_130 = arith.constant -2.00214257E-4 : f32
    %310 = vector.broadcast %cst_130 : f32 to vector<8x512xf32>
    %311 = arith.mulf %310, %309 : vector<8x512xf32>
    %cst_131 = arith.constant 1.00950558E-4 : f32
    %312 = vector.broadcast %cst_131 : f32 to vector<8x512xf32>
    %313 = arith.addf %311, %312 : vector<8x512xf32>
    %314 = arith.mulf %313, %309 : vector<8x512xf32>
    %cst_132 = arith.constant 0.00134934322 : f32
    %315 = vector.broadcast %cst_132 : f32 to vector<8x512xf32>
    %316 = arith.addf %314, %315 : vector<8x512xf32>
    %317 = arith.mulf %316, %309 : vector<8x512xf32>
    %cst_133 = arith.constant -0.00367342844 : f32
    %318 = vector.broadcast %cst_133 : f32 to vector<8x512xf32>
    %319 = arith.addf %317, %318 : vector<8x512xf32>
    %320 = arith.mulf %319, %309 : vector<8x512xf32>
    %cst_134 = arith.constant 0.00573950773 : f32
    %321 = vector.broadcast %cst_134 : f32 to vector<8x512xf32>
    %322 = arith.addf %320, %321 : vector<8x512xf32>
    %323 = arith.mulf %322, %309 : vector<8x512xf32>
    %cst_135 = arith.constant -0.0076224613 : f32
    %324 = vector.broadcast %cst_135 : f32 to vector<8x512xf32>
    %325 = arith.addf %323, %324 : vector<8x512xf32>
    %326 = arith.mulf %325, %309 : vector<8x512xf32>
    %cst_136 = arith.constant 0.00943887047 : f32
    %327 = vector.broadcast %cst_136 : f32 to vector<8x512xf32>
    %328 = arith.addf %326, %327 : vector<8x512xf32>
    %329 = arith.mulf %328, %309 : vector<8x512xf32>
    %cst_137 = arith.constant 1.00167406 : f32
    %330 = vector.broadcast %cst_137 : f32 to vector<8x512xf32>
    %331 = arith.addf %329, %330 : vector<8x512xf32>
    %332 = arith.mulf %331, %309 : vector<8x512xf32>
    %cst_138 = arith.constant 2.83297682 : f32
    %333 = vector.broadcast %cst_138 : f32 to vector<8x512xf32>
    %334 = arith.addf %332, %333 : vector<8x512xf32>
    %cst_139 = arith.constant 5.000000e+00 : f32
    %335 = vector.broadcast %cst_139 : f32 to vector<8x512xf32>
    %336 = arith.cmpf olt, %279, %335 : vector<8x512xf32>
    %337 = arith.select %336, %306, %334 : vector<8x512xi1>, vector<8x512xf32>
    %338 = arith.mulf %337, %271 : vector<8x512xf32>
    %cst_140 = arith.constant 1.41421354 : f32
    %339 = vector.broadcast %cst_140 : f32 to vector<8x512xf32>
    %340 = arith.mulf %339, %338 : vector<8x512xf32>
    %c3_141 = arith.constant 3 : index
    %c0_142 = arith.constant 0 : index
    %c0_143 = arith.constant 0 : index
    %341 = vector.load %arg5[%c3_141, %c0_142, %c0_143] : memref<5x8x512xf32, #tpu.memory_space<vmem>>, vector<1x8x512xf32>
    %342 = vector.shape_cast %341 : vector<1x8x512xf32> to vector<8x512xf32>
    %343 = vector.shape_cast %340 : vector<8x512xf32> to vector<1x8x512xf32>
    tpu.vector_store %arg5[%c3_141, %c0_142, %c0_143], %343 {strides = array<i32>} : memref<5x8x512xf32, #tpu.memory_space<vmem>>, vector<1x8x512xf32>,
    %344 = arith.mulf %4, %340 : vector<8x512xf32>
    %345 = arith.addf %0, %344 : vector<8x512xf32>
    %c3_144 = arith.constant 3 : index
    %c0_145 = arith.constant 0 : index
    %c0_146 = arith.constant 0 : index
    %346 = vector.load %arg4[%c3_144, %c0_145, %c0_146] : memref<5x8x512xf32, #tpu.memory_space<vmem>>, vector<1x8x512xf32>
    %347 = vector.shape_cast %346 : vector<1x8x512xf32> to vector<8x512xf32>
    %348 = vector.shape_cast %345 : vector<8x512xf32> to vector<1x8x512xf32>
    tpu.vector_store %arg4[%c3_144, %c0_145, %c0_146], %348 {strides = array<i32>} : memref<5x8x512xf32, #tpu.memory_space<vmem>>, vector<1x8x512xf32>,
    %c4 = arith.constant 4 : index
    %c0_147 = arith.constant 0 : index
    %c0_148 = arith.constant 0 : index
    %349 = vector.load %arg1[%c4, %c0_147, %c0_148] : memref<5x8x512xi32, #tpu.memory_space<vmem>>, vector<1x8x512xi32>
    %350 = vector.shape_cast %349 : vector<1x8x512xi32> to vector<8x512xi32>
    %c8388607_i32_149 = arith.constant 8388607 : i32
    %351 = vector.broadcast %c8388607_i32_149 : i32 to vector<8x512xi32>
    %352 = arith.andi %350, %351 : vector<8x512xi32>
    %353 = arith.sitofp %352 : vector<8x512xi32> to vector<8x512xf32>
    %cst_150 = arith.constant 2.38418579E-7 : f32
    %354 = vector.broadcast %cst_150 : f32 to vector<8x512xf32>
    %355 = arith.mulf %353, %354 : vector<8x512xf32>
    %cst_151 = arith.constant -0.99999988 : f32
    %356 = vector.broadcast %cst_151 : f32 to vector<8x512xf32>
    %357 = arith.addf %355, %356 : vector<8x512xf32>
    %cst_152 = arith.constant 1.000000e+00 : f32
    %358 = vector.broadcast %cst_152 : f32 to vector<8x512xf32>
    %359 = arith.subf %358, %357 : vector<8x512xf32>
    %cst_153 = arith.constant 1.000000e+00 : f32
    %360 = vector.broadcast %cst_153 : f32 to vector<8x512xf32>
    %361 = arith.addf %360, %357 : vector<8x512xf32>
    %362 = arith.mulf %359, %361 : vector<8x512xf32>
    %363 = math.log %362 : vector<8x512xf32>
    %cst_154 = arith.constant 0.000000e+00 : f32
    %364 = vector.broadcast %cst_154 : f32 to vector<8x512xf32>
    %365 = arith.subf %364, %363 : vector<8x512xf32>
    %cst_155 = arith.constant 2.500000e+00 : f32
    %366 = vector.broadcast %cst_155 : f32 to vector<8x512xf32>
    %367 = arith.subf %365, %366 : vector<8x512xf32>
    %cst_156 = arith.constant 2.81022636E-8 : f32
    %368 = vector.broadcast %cst_156 : f32 to vector<8x512xf32>
    %369 = arith.mulf %368, %367 : vector<8x512xf32>
    %cst_157 = arith.constant 3.43273939E-7 : f32
    %370 = vector.broadcast %cst_157 : f32 to vector<8x512xf32>
    %371 = arith.addf %369, %370 : vector<8x512xf32>
    %372 = arith.mulf %371, %367 : vector<8x512xf32>
    %cst_158 = arith.constant -3.5233877E-6 : f32
    %373 = vector.broadcast %cst_158 : f32 to vector<8x512xf32>
    %374 = arith.addf %372, %373 : vector<8x512xf32>
    %375 = arith.mulf %374, %367 : vector<8x512xf32>
    %cst_159 = arith.constant -4.39150654E-6 : f32
    %376 = vector.broadcast %cst_159 : f32 to vector<8x512xf32>
    %377 = arith.addf %375, %376 : vector<8x512xf32>
    %378 = arith.mulf %377, %367 : vector<8x512xf32>
    %cst_160 = arith.constant 2.1858087E-4 : f32
    %379 = vector.broadcast %cst_160 : f32 to vector<8x512xf32>
    %380 = arith.addf %378, %379 : vector<8x512xf32>
    %381 = arith.mulf %380, %367 : vector<8x512xf32>
    %cst_161 = arith.constant -0.00125372503 : f32
    %382 = vector.broadcast %cst_161 : f32 to vector<8x512xf32>
    %383 = arith.addf %381, %382 : vector<8x512xf32>
    %384 = arith.mulf %383, %367 : vector<8x512xf32>
    %cst_162 = arith.constant -0.00417768164 : f32
    %385 = vector.broadcast %cst_162 : f32 to vector<8x512xf32>
    %386 = arith.addf %384, %385 : vector<8x512xf32>
    %387 = arith.mulf %386, %367 : vector<8x512xf32>
    %cst_163 = arith.constant 0.246640727 : f32
    %388 = vector.broadcast %cst_163 : f32 to vector<8x512xf32>
    %389 = arith.addf %387, %388 : vector<8x512xf32>
    %390 = arith.mulf %389, %367 : vector<8x512xf32>
    %cst_164 = arith.constant 1.50140941 : f32
    %391 = vector.broadcast %cst_164 : f32 to vector<8x512xf32>
    %392 = arith.addf %390, %391 : vector<8x512xf32>
    %393 = math.sqrt %365 : vector<8x512xf32>
    %cst_165 = arith.constant 3.000000e+00 : f32
    %394 = vector.broadcast %cst_165 : f32 to vector<8x512xf32>
    %395 = arith.subf %393, %394 : vector<8x512xf32>
    %cst_166 = arith.constant -2.00214257E-4 : f32
    %396 = vector.broadcast %cst_166 : f32 to vector<8x512xf32>
    %397 = arith.mulf %396, %395 : vector<8x512xf32>
    %cst_167 = arith.constant 1.00950558E-4 : f32
    %398 = vector.broadcast %cst_167 : f32 to vector<8x512xf32>
    %399 = arith.addf %397, %398 : vector<8x512xf32>
    %400 = arith.mulf %399, %395 : vector<8x512xf32>
    %cst_168 = arith.constant 0.00134934322 : f32
    %401 = vector.broadcast %cst_168 : f32 to vector<8x512xf32>
    %402 = arith.addf %400, %401 : vector<8x512xf32>
    %403 = arith.mulf %402, %395 : vector<8x512xf32>
    %cst_169 = arith.constant -0.00367342844 : f32
    %404 = vector.broadcast %cst_169 : f32 to vector<8x512xf32>
    %405 = arith.addf %403, %404 : vector<8x512xf32>
    %406 = arith.mulf %405, %395 : vector<8x512xf32>
    %cst_170 = arith.constant 0.00573950773 : f32
    %407 = vector.broadcast %cst_170 : f32 to vector<8x512xf32>
    %408 = arith.addf %406, %407 : vector<8x512xf32>
    %409 = arith.mulf %408, %395 : vector<8x512xf32>
    %cst_171 = arith.constant -0.0076224613 : f32
    %410 = vector.broadcast %cst_171 : f32 to vector<8x512xf32>
    %411 = arith.addf %409, %410 : vector<8x512xf32>
    %412 = arith.mulf %411, %395 : vector<8x512xf32>
    %cst_172 = arith.constant 0.00943887047 : f32
    %413 = vector.broadcast %cst_172 : f32 to vector<8x512xf32>
    %414 = arith.addf %412, %413 : vector<8x512xf32>
    %415 = arith.mulf %414, %395 : vector<8x512xf32>
    %cst_173 = arith.constant 1.00167406 : f32
    %416 = vector.broadcast %cst_173 : f32 to vector<8x512xf32>
    %417 = arith.addf %415, %416 : vector<8x512xf32>
    %418 = arith.mulf %417, %395 : vector<8x512xf32>
    %cst_174 = arith.constant 2.83297682 : f32
    %419 = vector.broadcast %cst_174 : f32 to vector<8x512xf32>
    %420 = arith.addf %418, %419 : vector<8x512xf32>
    %cst_175 = arith.constant 5.000000e+00 : f32
    %421 = vector.broadcast %cst_175 : f32 to vector<8x512xf32>
    %422 = arith.cmpf olt, %365, %421 : vector<8x512xf32>
    %423 = arith.select %422, %392, %420 : vector<8x512xi1>, vector<8x512xf32>
    %424 = arith.mulf %423, %357 : vector<8x512xf32>
    %cst_176 = arith.constant 1.41421354 : f32
    %425 = vector.broadcast %cst_176 : f32 to vector<8x512xf32>
    %426 = arith.mulf %425, %424 : vector<8x512xf32>
    %c4_177 = arith.constant 4 : index
    %c0_178 = arith.constant 0 : index
    %c0_179 = arith.constant 0 : index
    %427 = vector.load %arg5[%c4_177, %c0_178, %c0_179] : memref<5x8x512xf32, #tpu.memory_space<vmem>>, vector<1x8x512xf32>
    %428 = vector.shape_cast %427 : vector<1x8x512xf32> to vector<8x512xf32>
    %429 = vector.shape_cast %426 : vector<8x512xf32> to vector<1x8x512xf32>
    tpu.vector_store %arg5[%c4_177, %c0_178, %c0_179], %429 {strides = array<i32>} : memref<5x8x512xf32, #tpu.memory_space<vmem>>, vector<1x8x512xf32>,
    %430 = arith.mulf %4, %426 : vector<8x512xf32>
    %431 = arith.addf %0, %430 : vector<8x512xf32>
    %c4_180 = arith.constant 4 : index
    %c0_181 = arith.constant 0 : index
    %c0_182 = arith.constant 0 : index
    %432 = vector.load %arg4[%c4_180, %c0_181, %c0_182] : memref<5x8x512xf32, #tpu.memory_space<vmem>>, vector<1x8x512xf32>
    %433 = vector.shape_cast %432 : vector<1x8x512xf32> to vector<8x512xf32>
    %434 = vector.shape_cast %431 : vector<8x512xf32> to vector<1x8x512xf32>
    tpu.vector_store %arg4[%c4_180, %c0_181, %c0_182], %434 {strides = array<i32>} : memref<5x8x512xf32, #tpu.memory_space<vmem>>, vector<1x8x512xf32>,
    return
  }
  func.func @transform_0(%arg0: i32) -> (i32, i32, i32) {
    %c0_i32 = arith.constant 0 : i32
    %c0_i32_0 = arith.constant 0 : i32
    %c0_i32_1 = arith.constant 0 : i32
    return %c0_i32, %arg0, %c0_i32_0 : i32, i32, i32
  }
  func.func @transform_1(%arg0: i32) -> (i32, i32) {
    %c0_i32 = arith.constant 0 : i32
    %c0_i32_0 = arith.constant 0 : i32
    return %arg0, %c0_i32 : i32, i32
  }
  func.func @transform_2(%arg0: i32) -> (i32, i32) {
    %c0_i32 = arith.constant 0 : i32
    %c0_i32_0 = arith.constant 0 : i32
    return %arg0, %c0_i32 : i32, i32
  }
  func.func @transform_3(%arg0: i32) -> (i32, i32, i32) {
    %c0_i32 = arith.constant 0 : i32
    %c0_i32_0 = arith.constant 0 : i32
    %c0_i32_1 = arith.constant 0 : i32
    return %c0_i32, %arg0, %c0_i32_0 : i32, i32, i32
  }
  func.func @transform_4(%arg0: i32) -> (i32, i32, i32) {
    %c0_i32 = arith.constant 0 : i32
    %c0_i32_0 = arith.constant 0 : i32
    %c0_i32_1 = arith.constant 0 : i32
    return %c0_i32, %arg0, %c0_i32_0 : i32, i32, i32
  }
}

</mosaic_0001>

<llo_original>
// kernel: reparametrize_iw.1
$region0: #{reparametrize_iw.1}
  #allocation0 [shape = 'u32[]', space=smem, size = 0x4, offset = 0x4, fixed_abs, tag = 'smem constant byte address 0x4 - core index']
  #allocation1 [shape = 'u32[144,128]{1,0:T(1,128)}', space=vmem, size = 0x12000, scoped, tag = 'internal scratch']
  %s0 = inlined_call_operand.vmem [shape: u32[5,8,512], index: 0, kind: input, shape index: {}]
  %s1 = inlined_call_operand.vmem [shape: f32[8,512], index: 1, kind: input, shape index: {}]
  %s2 = inlined_call_operand.vmem [shape: f32[8,512], index: 2, kind: input, shape index: {}]
  %s3 = inlined_call_operand.vmem [shape: f32[5,8,512], index: 3, kind: output, shape index: {0}]
  %s4 = inlined_call_operand.vmem [shape: f32[5,8,512], index: 4, kind: output, shape index: {1}]
  %5 = xla_tuple %s3, %s4
  %s6 = sld [smem:[#allocation0]]
  $region30: #{reparametrize_iw.1} parent=0
    _
  %s8 = ssub.s32 1, %s6
  %s9 = scalar_select 0, %s8, %s6
  // Predicated region
  $region2: #{reparametrize_iw.1} parent=0 // pred_check
    _
  $region3: #{reparametrize_iw.1} parent=0 // pred_check_branch
    %11 = sbr.rel (0) target = $region5
  $region4: #{reparametrize_iw.1} parent=0 // pred_region
    _
  $region5: #{reparametrize_iw.1} parent=0 // pred_fallthru
    _
  // Predicated region
  $region6: #{reparametrize_iw.1} parent=0 // pred_check
    _
  $region7: #{reparametrize_iw.1} parent=0 // pred_check_branch
    %13 = sbr.rel (0) target = $region9
  $region8: #{reparametrize_iw.1} parent=0 // pred_region
    _
  $region9: #{reparametrize_iw.1} parent=0 // pred_fallthru
    _
  // Predicated region
  $region10: #{reparametrize_iw.1} parent=0 // pred_check
    _
  $region11: #{reparametrize_iw.1} parent=0 // pred_check_branch
    %15 = sbr.rel (0) target = $region13
  $region12: #{reparametrize_iw.1} parent=0 // pred_region
    _
  $region13: #{reparametrize_iw.1} parent=0 // pred_fallthru
    _
  %v16 = vld [vmem:[%s1] sm:$0xff]
  %v17 = vld [vmem:[%s1 + $0x8] sm:$0xff]
  %v18 = vld [vmem:[%s1 + $0x10] sm:$0xff]
  %v19 = vld [vmem:[%s1 + $0x18] sm:$0xff]
  %v20 = vld [vmem:[%s2] sm:$0xff]
  %v21 = vld [vmem:[%s2 + $0x8] sm:$0xff]
  %v22 = vld [vmem:[%s2 + $0x10] sm:$0xff]
  %v23 = vld [vmem:[%s2 + $0x18] sm:$0xff]
  %v24 = vmul.f32 %v20, 0.5
  %v25 = vmul.f32 %v21, 0.5
  %v26 = vmul.f32 %v22, 0.5
  %v27 = vmul.f32 %v23, 0.5
  %v28 = vmul.f32 %v24, 1.442695
  %v29 = vpow.pop %v28
  %v30 = vmul.f32 %v25, 1.442695
  %v31 = vpow.pop %v30
  %v32 = vmul.f32 %v26, 1.442695
  %v33 = vpow.pop %v32
  %v34 = vmul.f32 %v27, 1.442695
  %v35 = vpow.pop %v34
  %v36 = vld [vmem:[%s0] sm:$0xff]
  %v37 = vld [vmem:[%s0 + $0x8] sm:$0xff]
  %v38 = vld [vmem:[%s0 + $0x10] sm:$0xff]
  %v39 = vld [vmem:[%s0 + $0x18] sm:$0xff]
  %v40 = vand.u32 %v36, 8388607
  %v41 = vand.u32 %v37, 8388607
  %v42 = vand.u32 %v38, 8388607
  %v43 = vand.u32 %v39, 8388607
  %v44 = vcvt.s32.f32 %v40
  %v45 = vcvt.s32.f32 %v41
  %v46 = vcvt.s32.f32 %v42
  %v47 = vcvt.s32.f32 %v43
  %v48 = vmul.f32 %v44, 2.3841858e-07
  %v49 = vmul.f32 %v45, 2.3841858e-07
  %v50 = vmul.f32 %v46, 2.3841858e-07
  %v51 = vmul.f32 %v47, 2.3841858e-07
  %v52 = vadd.f32 %v48, -0.9999999
  %v53 = vadd.f32 %v49, -0.9999999
  %v54 = vadd.f32 %v50, -0.9999999
  %v55 = vadd.f32 %v51, -0.9999999
  %v56 = vsub.f32 1.0, %v52
  %v57 = vsub.f32 1.0, %v53
  %v58 = vsub.f32 1.0, %v54
  %v59 = vsub.f32 1.0, %v55
  %v60 = vadd.f32 %v52, 1.0
  %v61 = vadd.f32 %v53, 1.0
  %v62 = vadd.f32 %v54, 1.0
  %v63 = vadd.f32 %v55, 1.0
  %v64 = vmul.f32 %v56, %v60
  %v65 = vmul.f32 %v57, %v61
  %v66 = vmul.f32 %v58, %v62
  %v67 = vmul.f32 %v59, %v63
  %v68 = vlog2.pop %v64
  %v69 = vmul.f32 %v68, 0.6931472
  %v70 = vlog2.pop %v65
  %v71 = vmul.f32 %v70, 0.6931472
  %v72 = vlog2.pop %v66
  %v73 = vmul.f32 %v72, 0.6931472
  %v74 = vlog2.pop %v67
  %v75 = vmul.f32 %v74, 0.6931472
  %v76 = vsub.f32 0.0, %v69
  %v77 = vsub.f32 0.0, %v71
  %v78 = vsub.f32 0.0, %v73
  %v79 = vsub.f32 0.0, %v75
  %v80 = vsub.f32 %v76, 2.5
  %v81 = vsub.f32 %v77, 2.5
  %v82 = vsub.f32 %v78, 2.5
  %v83 = vsub.f32 %v79, 2.5
  %v84 = vmul.f32 %v80, 2.8102264e-08
  %v85 = vmul.f32 %v81, 2.8102264e-08
  %v86 = vmul.f32 %v82, 2.8102264e-08
  %v87 = vmul.f32 %v83, 2.8102264e-08
  %v88 = vadd.f32 %v84, 3.4327394e-07
  %v89 = vadd.f32 %v85, 3.4327394e-07
  %v90 = vadd.f32 %v86, 3.4327394e-07
  %v91 = vadd.f32 %v87, 3.4327394e-07
  %v92 = vmul.f32 %v88, %v80
  %v93 = vmul.f32 %v89, %v81
  %v94 = vmul.f32 %v90, %v82
  %v95 = vmul.f32 %v91, %v83
  %v96 = vadd.f32 %v92, -3.5233877e-06
  %v97 = vadd.f32 %v93, -3.5233877e-06
  %v98 = vadd.f32 %v94, -3.5233877e-06
  %v99 = vadd.f32 %v95, -3.5233877e-06
  %v100 = vmul.f32 %v96, %v80
  %v101 = vmul.f32 %v97, %v81
  %v102 = vmul.f32 %v98, %v82
  %v103 = vmul.f32 %v99, %v83
  %v104 = vadd.f32 %v100, -4.3915065e-06
  %v105 = vadd.f32 %v101, -4.3915065e-06
  %v106 = vadd.f32 %v102, -4.3915065e-06
  %v107 = vadd.f32 %v103, -4.3915065e-06
  %v108 = vmul.f32 %v104, %v80
  %v109 = vmul.f32 %v105, %v81
  %v110 = vmul.f32 %v106, %v82
  %v111 = vmul.f32 %v107, %v83
  %v112 = vadd.f32 %v108, 0.00021858087
  %v113 = vadd.f32 %v109, 0.00021858087
  %v114 = vadd.f32 %v110, 0.00021858087
  %v115 = vadd.f32 %v111, 0.00021858087
  %v116 = vmul.f32 %v112, %v80
  %v117 = vmul.f32 %v113, %v81
  %v118 = vmul.f32 %v114, %v82
  %v119 = vmul.f32 %v115, %v83
  %v120 = vadd.f32 %v116, -0.001253725
  %v121 = vadd.f32 %v117, -0.001253725
  %v122 = vadd.f32 %v118, -0.001253725
  %v123 = vadd.f32 %v119, -0.001253725
  %v124 = vmul.f32 %v120, %v80
  %v125 = vmul.f32 %v121, %v81
  %v126 = vmul.f32 %v122, %v82
  %v127 = vmul.f32 %v123, %v83
  %v128 = vadd.f32 %v124, -0.0041776816
  %v129 = vadd.f32 %v125, -0.0041776816
  %v130 = vadd.f32 %v126, -0.0041776816
  %v131 = vadd.f32 %v127, -0.0041776816
  %v132 = vmul.f32 %v128, %v80
  %v133 = vmul.f32 %v129, %v81
  %v134 = vmul.f32 %v130, %v82
  %v135 = vmul.f32 %v131, %v83
  %v136 = vadd.f32 %v132, 0.24664073
  %v137 = vadd.f32 %v133, 0.24664073
  %v138 = vadd.f32 %v134, 0.24664073
  %v139 = vadd.f32 %v135, 0.24664073
  %v140 = vmul.f32 %v136, %v80
  %v141 = vmul.f32 %v137, %v81
  %v142 = vmul.f32 %v138, %v82
  %v143 = vmul.f32 %v139, %v83
  %v144 = vadd.f32 %v140, 1.5014094
  %v145 = vadd.f32 %v141, 1.5014094
  %v146 = vadd.f32 %v142, 1.5014094
  %v147 = vadd.f32 %v143, 1.5014094
  %v148 = vrsqrt.pop %v76
  %v149 = vmul.f32 %v76, %v148
  %vm150 = vcmp.eq.f32.partialorder %v76, inf
  %v151 = vsel %vm150, %v76, %v149
  %vm152 = vcmp.eq.f32.partialorder %v76, 0.0
  %v153 = vand.u32 %v76, 2147483648
  %v154 = vsel %vm152, %v153, %v151
  %v155 = vrsqrt.pop %v77
  %v156 = vmul.f32 %v77, %v155
  %vm157 = vcmp.eq.f32.partialorder %v77, inf
  %v158 = vsel %vm157, %v77, %v156
  %vm159 = vcmp.eq.f32.partialorder %v77, 0.0
  %v160 = vand.u32 %v77, 2147483648
  %v161 = vsel %vm159, %v160, %v158
  %v162 = vrsqrt.pop %v78
  %v163 = vmul.f32 %v78, %v162
  %vm164 = vcmp.eq.f32.partialorder %v78, inf
  %v165 = vsel %vm164, %v78, %v163
  %vm166 = vcmp.eq.f32.partialorder %v78, 0.0
  %v167 = vand.u32 %v78, 2147483648
  %v168 = vsel %vm166, %v167, %v165
  %v169 = vrsqrt.pop %v79
  %v170 = vmul.f32 %v79, %v169
  %vm171 = vcmp.eq.f32.partialorder %v79, inf
  %v172 = vsel %vm171, %v79, %v170
  %vm173 = vcmp.eq.f32.partialorder %v79, 0.0
  %v174 = vand.u32 %v79, 2147483648
  %v175 = vsel %vm173, %v174, %v172
  %v176 = vsub.f32 %v154, 3.0
  %v177 = vsub.f32 %v161, 3.0
  %v178 = vsub.f32 %v168, 3.0
  %v179 = vsub.f32 %v175, 3.0
  %v180 = vmul.f32 %v176, -0.00020021426
  %v181 = vmul.f32 %v177, -0.00020021426
  %v182 = vmul.f32 %v178, -0.00020021426
  %v183 = vmul.f32 %v179, -0.00020021426
  %v184 = vadd.f32 %v180, 0.00010095056
  %v185 = vadd.f32 %v181, 0.00010095056
  %v186 = vadd.f32 %v182, 0.00010095056
  %v187 = vadd.f32 %v183, 0.00010095056
  %v188 = vmul.f32 %v184, %v176
  %v189 = vmul.f32 %v185, %v177
  %v190 = vmul.f32 %v186, %v178
  %v191 = vmul.f32 %v187, %v179
  %v192 = vadd.f32 %v188, 0.0013493432
  %v193 = vadd.f32 %v189, 0.0013493432
  %v194 = vadd.f32 %v190, 0.0013493432
  %v195 = vadd.f32 %v191, 0.0013493432
  %v196 = vmul.f32 %v192, %v176
  %v197 = vmul.f32 %v193, %v177
  %v198 = vmul.f32 %v194, %v178
  %v199 = vmul.f32 %v195, %v179
  %v200 = vadd.f32 %v196, -0.0036734284
  %v201 = vadd.f32 %v197, -0.0036734284
  %v202 = vadd.f32 %v198, -0.0036734284
  %v203 = vadd.f32 %v199, -0.0036734284
  %v204 = vmul.f32 %v200, %v176
  %v205 = vmul.f32 %v201, %v177
  %v206 = vmul.f32 %v202, %v178
  %v207 = vmul.f32 %v203, %v179
  %v208 = vadd.f32 %v204, 0.0057395077
  %v209 = vadd.f32 %v205, 0.0057395077
  %v210 = vadd.f32 %v206, 0.0057395077
  %v211 = vadd.f32 %v207, 0.0057395077
  %v212 = vmul.f32 %v208, %v176
  %v213 = vmul.f32 %v209, %v177
  %v214 = vmul.f32 %v210, %v178
  %v215 = vmul.f32 %v211, %v179
  %v216 = vadd.f32 %v212, -0.0076224613
  %v217 = vadd.f32 %v213, -0.0076224613
  %v218 = vadd.f32 %v214, -0.0076224613
  %v219 = vadd.f32 %v215, -0.0076224613
  %v220 = vmul.f32 %v216, %v176
  %v221 = vmul.f32 %v217, %v177
  %v222 = vmul.f32 %v218, %v178
  %v223 = vmul.f32 %v219, %v179
  %v224 = vadd.f32 %v220, 0.0094388705
  %v225 = vadd.f32 %v221, 0.0094388705
  %v226 = vadd.f32 %v222, 0.0094388705
  %v227 = vadd.f32 %v223, 0.0094388705
  %v228 = vmul.f32 %v224, %v176
  %v229 = vmul.f32 %v225, %v177
  %v230 = vmul.f32 %v226, %v178
  %v231 = vmul.f32 %v227, %v179
  %v232 = vadd.f32 %v228, 1.001674
  %v233 = vadd.f32 %v229, 1.001674
  %v234 = vadd.f32 %v230, 1.001674
  %v235 = vadd.f32 %v231, 1.001674
  %v236 = vmul.f32 %v232, %v176
  %v237 = vmul.f32 %v233, %v177
  %v238 = vmul.f32 %v234, %v178
  %v239 = vmul.f32 %v235, %v179
  %v240 = vadd.f32 %v236, 2.8329768
  %v241 = vadd.f32 %v237, 2.8329768
  %v242 = vadd.f32 %v238, 2.8329768
  %v243 = vadd.f32 %v239, 2.8329768
  %vm244 = vcmp.lt.f32.partialorder %v76, 5.0
  %vm245 = vcmp.lt.f32.partialorder %v77, 5.0
  %vm246 = vcmp.lt.f32.partialorder %v78, 5.0
  %vm247 = vcmp.lt.f32.partialorder %v79, 5.0
  %v248 = vsel %vm244, %v144, %v240
  %v249 = vsel %vm245, %v145, %v241
  %v250 = vsel %vm246, %v146, %v242
  %v251 = vsel %vm247, %v147, %v243
  %v252 = vmul.f32 %v248, %v52
  %v253 = vmul.f32 %v249, %v53
  %v254 = vmul.f32 %v250, %v54
  %v255 = vmul.f32 %v251, %v55
  %v256 = vmul.f32 %v252, 1.4142135
  %v257 = vmul.f32 %v253, 1.4142135
  %v258 = vmul.f32 %v254, 1.4142135
  %v259 = vmul.f32 %v255, 1.4142135
  %260 = vst [vmem:[%s4] sm:$0xff] %v256
  %261 = vst [vmem:[%s4 + $0x8] sm:$0xff] %v257
  %262 = vst [vmem:[%s4 + $0x10] sm:$0xff] %v258
  %263 = vst [vmem:[%s4 + $0x18] sm:$0xff] %v259
  %v264 = vmul.f32 %v29, %v256
  %v265 = vmul.f32 %v31, %v257
  %v266 = vmul.f32 %v33, %v258
  %v267 = vmul.f32 %v35, %v259
  %v268 = vadd.f32 %v16, %v264
  %v269 = vadd.f32 %v17, %v265
  %v270 = vadd.f32 %v18, %v266
  %v271 = vadd.f32 %v19, %v267
  %272 = vst [vmem:[%s3] sm:$0xff] %v268
  %273 = vst [vmem:[%s3 + $0x8] sm:$0xff] %v269
  %274 = vst [vmem:[%s3 + $0x10] sm:$0xff] %v270
  %275 = vst [vmem:[%s3 + $0x18] sm:$0xff] %v271
  %s276 = scalar_lea.vmem %s0, 32
  %v277 = vld [vmem:[%s276] sm:$0xff]
  %v278 = vld [vmem:[%s276 + $0x8] sm:$0xff]
  %v279 = vld [vmem:[%s276 + $0x10] sm:$0xff]
  %v280 = vld [vmem:[%s276 + $0x18] sm:$0xff]
  %v281 = vand.u32 %v277, 8388607
  %v282 = vand.u32 %v278, 8388607
  %v283 = vand.u32 %v279, 8388607
  %v284 = vand.u32 %v280, 8388607
  %v285 = vcvt.s32.f32 %v281
  %v286 = vcvt.s32.f32 %v282
  %v287 = vcvt.s32.f32 %v283
  %v288 = vcvt.s32.f32 %v284
  %v289 = vmul.f32 %v285, 2.3841858e-07
  %v290 = vmul.f32 %v286, 2.3841858e-07
  %v291 = vmul.f32 %v287, 2.3841858e-07
  %v292 = vmul.f32 %v288, 2.3841858e-07
  %v293 = vadd.f32 %v289, -0.9999999
  %v294 = vadd.f32 %v290, -0.9999999
  %v295 = vadd.f32 %v291, -0.9999999
  %v296 = vadd.f32 %v292, -0.9999999
  %v297 = vsub.f32 1.0, %v293
  %v298 = vsub.f32 1.0, %v294
  %v299 = vsub.f32 1.0, %v295
  %v300 = vsub.f32 1.0, %v296
  %v301 = vadd.f32 %v293, 1.0
  %v302 = vadd.f32 %v294, 1.0
  %v303 = vadd.f32 %v295, 1.0
  %v304 = vadd.f32 %v296, 1.0
  %v305 = vmul.f32 %v297, %v301
  %v306 = vmul.f32 %v298, %v302
  %v307 = vmul.f32 %v299, %v303
  %v308 = vmul.f32 %v300, %v304
  %v309 = vlog2.pop %v305
  %v310 = vmul.f32 %v309, 0.6931472
  %v311 = vlog2.pop %v306
  %v312 = vmul.f32 %v311, 0.6931472
  %v313 = vlog2.pop %v307
  %v314 = vmul.f32 %v313, 0.6931472
  %v315 = vlog2.pop %v308
  %v316 = vmul.f32 %v315, 0.6931472
  %v317 = vsub.f32 0.0, %v310
  %v318 = vsub.f32 0.0, %v312
  %v319 = vsub.f32 0.0, %v314
  %v320 = vsub.f32 0.0, %v316
  %v321 = vsub.f32 %v317, 2.5
  %v322 = vsub.f32 %v318, 2.5
  %v323 = vsub.f32 %v319, 2.5
  %v324 = vsub.f32 %v320, 2.5
  %v325 = vmul.f32 %v321, 2.8102264e-08
  %v326 = vmul.f32 %v322, 2.8102264e-08
  %v327 = vmul.f32 %v323, 2.8102264e-08
  %v328 = vmul.f32 %v324, 2.8102264e-08
  %v329 = vadd.f32 %v325, 3.4327394e-07
  %v330 = vadd.f32 %v326, 3.4327394e-07
  %v331 = vadd.f32 %v327, 3.4327394e-07
  %v332 = vadd.f32 %v328, 3.4327394e-07
  %v333 = vmul.f32 %v329, %v321
  %v334 = vmul.f32 %v330, %v322
  %v335 = vmul.f32 %v331, %v323
  %v336 = vmul.f32 %v332, %v324
  %v337 = vadd.f32 %v333, -3.5233877e-06
  %v338 = vadd.f32 %v334, -3.5233877e-06
  %v339 = vadd.f32 %v335, -3.5233877e-06
  %v340 = vadd.f32 %v336, -3.5233877e-06
  %v341 = vmul.f32 %v337, %v321
  %v342 = vmul.f32 %v338, %v322
  %v343 = vmul.f32 %v339, %v323
  %v344 = vmul.f32 %v340, %v324
  %v345 = vadd.f32 %v341, -4.3915065e-06
  %v346 = vadd.f32 %v342, -4.3915065e-06
  %v347 = vadd.f32 %v343, -4.3915065e-06
  %v348 = vadd.f32 %v344, -4.3915065e-06
  %v349 = vmul.f32 %v345, %v321
  %v350 = vmul.f32 %v346, %v322
  %v351 = vmul.f32 %v347, %v323
  %v352 = vmul.f32 %v348, %v324
  %v353 = vadd.f32 %v349, 0.00021858087
  %v354 = vadd.f32 %v350, 0.00021858087
  %v355 = vadd.f32 %v351, 0.00021858087
  %v356 = vadd.f32 %v352, 0.00021858087
  %v357 = vmul.f32 %v353, %v321
  %v358 = vmul.f32 %v354, %v322
  %v359 = vmul.f32 %v355, %v323
  %v360 = vmul.f32 %v356, %v324
  %v361 = vadd.f32 %v357, -0.001253725
  %v362 = vadd.f32 %v358, -0.001253725
  %v363 = vadd.f32 %v359, -0.001253725
  %v364 = vadd.f32 %v360, -0.001253725
  %v365 = vmul.f32 %v361, %v321
  %v366 = vmul.f32 %v362, %v322
  %v367 = vmul.f32 %v363, %v323
  %v368 = vmul.f32 %v364, %v324
  %v369 = vadd.f32 %v365, -0.0041776816
  %v370 = vadd.f32 %v366, -0.0041776816
  %v371 = vadd.f32 %v367, -0.0041776816
  %v372 = vadd.f32 %v368, -0.0041776816
  %v373 = vmul.f32 %v369, %v321
  %v374 = vmul.f32 %v370, %v322
  %v375 = vmul.f32 %v371, %v323
  %v376 = vmul.f32 %v372, %v324
  %v377 = vadd.f32 %v373, 0.24664073
  %v378 = vadd.f32 %v374, 0.24664073
  %v379 = vadd.f32 %v375, 0.24664073
  %v380 = vadd.f32 %v376, 0.24664073
  %v381 = vmul.f32 %v377, %v321
  %v382 = vmul.f32 %v378, %v322
  %v383 = vmul.f32 %v379, %v323
  %v384 = vmul.f32 %v380, %v324
  %v385 = vadd.f32 %v381, 1.5014094
  %v386 = vadd.f32 %v382, 1.5014094
  %v387 = vadd.f32 %v383, 1.5014094
  %v388 = vadd.f32 %v384, 1.5014094
  %v389 = vrsqrt.pop %v317
  %v390 = vmul.f32 %v317, %v389
  %vm391 = vcmp.eq.f32.partialorder %v317, inf
  %v392 = vsel %vm391, %v317, %v390
  %vm393 = vcmp.eq.f32.partialorder %v317, 0.0
  %v394 = vand.u32 %v317, 2147483648
  %v395 = vsel %vm393, %v394, %v392
  %v396 = vrsqrt.pop %v318
  %v397 = vmul.f32 %v318, %v396
  %vm398 = vcmp.eq.f32.partialorder %v318, inf
  %v399 = vsel %vm398, %v318, %v397
  %vm400 = vcmp.eq.f32.partialorder %v318, 0.0
  %v401 = vand.u32 %v318, 2147483648
  %v402 = vsel %vm400, %v401, %v399
  %v403 = vrsqrt.pop %v319
  %v404 = vmul.f32 %v319, %v403
  %vm405 = vcmp.eq.f32.partialorder %v319, inf
  %v406 = vsel %vm405, %v319, %v404
  %vm407 = vcmp.eq.f32.partialorder %v319, 0.0
  %v408 = vand.u32 %v319, 2147483648
  %v409 = vsel %vm407, %v408, %v406
  %v410 = vrsqrt.pop %v320
  %v411 = vmul.f32 %v320, %v410
  %vm412 = vcmp.eq.f32.partialorder %v320, inf
  %v413 = vsel %vm412, %v320, %v411
  %vm414 = vcmp.eq.f32.partialorder %v320, 0.0
  %v415 = vand.u32 %v320, 2147483648
  %v416 = vsel %vm414, %v415, %v413
  %v417 = vsub.f32 %v395, 3.0
  %v418 = vsub.f32 %v402, 3.0
  %v419 = vsub.f32 %v409, 3.0
  %v420 = vsub.f32 %v416, 3.0
  %v421 = vmul.f32 %v417, -0.00020021426
  %v422 = vmul.f32 %v418, -0.00020021426
  %v423 = vmul.f32 %v419, -0.00020021426
  %v424 = vmul.f32 %v420, -0.00020021426
  %v425 = vadd.f32 %v421, 0.00010095056
  %v426 = vadd.f32 %v422, 0.00010095056
  %v427 = vadd.f32 %v423, 0.00010095056
  %v428 = vadd.f32 %v424, 0.00010095056
  %v429 = vmul.f32 %v425, %v417
  %v430 = vmul.f32 %v426, %v418
  %v431 = vmul.f32 %v427, %v419
  %v432 = vmul.f32 %v428, %v420
  %v433 = vadd.f32 %v429, 0.0013493432
  %v434 = vadd.f32 %v430, 0.0013493432
  %v435 = vadd.f32 %v431, 0.0013493432
  %v436 = vadd.f32 %v432, 0.0013493432
  %v437 = vmul.f32 %v433, %v417
  %v438 = vmul.f32 %v434, %v418
  %v439 = vmul.f32 %v435, %v419
  %v440 = vmul.f32 %v436, %v420
  %v441 = vadd.f32 %v437, -0.0036734284
  %v442 = vadd.f32 %v438, -0.0036734284
  %v443 = vadd.f32 %v439, -0.0036734284
  %v444 = vadd.f32 %v440, -0.0036734284
  %v445 = vmul.f32 %v441, %v417
  %v446 = vmul.f32 %v442, %v418
  %v447 = vmul.f32 %v443, %v419
  %v448 = vmul.f32 %v444, %v420
  %v449 = vadd.f32 %v445, 0.0057395077
  %v450 = vadd.f32 %v446, 0.0057395077
  %v451 = vadd.f32 %v447, 0.0057395077
  %v452 = vadd.f32 %v448, 0.0057395077
  %v453 = vmul.f32 %v449, %v417
  %v454 = vmul.f32 %v450, %v418
  %v455 = vmul.f32 %v451, %v419
  %v456 = vmul.f32 %v452, %v420
  %v457 = vadd.f32 %v453, -0.0076224613
  %v458 = vadd.f32 %v454, -0.0076224613
  %v459 = vadd.f32 %v455, -0.0076224613
  %v460 = vadd.f32 %v456, -0.0076224613
  %v461 = vmul.f32 %v457, %v417
  %v462 = vmul.f32 %v458, %v418
  %v463 = vmul.f32 %v459, %v419
  %v464 = vmul.f32 %v460, %v420
  %v465 = vadd.f32 %v461, 0.0094388705
  %v466 = vadd.f32 %v462, 0.0094388705
  %v467 = vadd.f32 %v463, 0.0094388705
  %v468 = vadd.f32 %v464, 0.0094388705
  %v469 = vmul.f32 %v465, %v417
  %v470 = vmul.f32 %v466, %v418
  %v471 = vmul.f32 %v467, %v419
  %v472 = vmul.f32 %v468, %v420
  %v473 = vadd.f32 %v469, 1.001674
  %v474 = vadd.f32 %v470, 1.001674
  %v475 = vadd.f32 %v471, 1.001674
  %v476 = vadd.f32 %v472, 1.001674
  %v477 = vmul.f32 %v473, %v417
  %v478 = vmul.f32 %v474, %v418
  %v479 = vmul.f32 %v475, %v419
  %v480 = vmul.f32 %v476, %v420
  %v481 = vadd.f32 %v477, 2.8329768
  %v482 = vadd.f32 %v478, 2.8329768
  %v483 = vadd.f32 %v479, 2.8329768
  %v484 = vadd.f32 %v480, 2.8329768
  %vm485 = vcmp.lt.f32.partialorder %v317, 5.0
  %vm486 = vcmp.lt.f32.partialorder %v318, 5.0
  %vm487 = vcmp.lt.f32.partialorder %v319, 5.0
  %vm488 = vcmp.lt.f32.partialorder %v320, 5.0
  %v489 = vsel %vm485, %v385, %v481
  %v490 = vsel %vm486, %v386, %v482
  %v491 = vsel %vm487, %v387, %v483
  %v492 = vsel %vm488, %v388, %v484
  %v493 = vmul.f32 %v489, %v293
  %v494 = vmul.f32 %v490, %v294
  %v495 = vmul.f32 %v491, %v295
  %v496 = vmul.f32 %v492, %v296
  %v497 = vmul.f32 %v493, 1.4142135
  %v498 = vmul.f32 %v494, 1.4142135
  %v499 = vmul.f32 %v495, 1.4142135
  %v500 = vmul.f32 %v496, 1.4142135
  %s501 = scalar_lea.vmem %s4, 32
  %502 = vst [vmem:[%s501] sm:$0xff] %v497
  %503 = vst [vmem:[%s501 + $0x8] sm:$0xff] %v498
  %504 = vst [vmem:[%s501 + $0x10] sm:$0xff] %v499
  %505 = vst [vmem:[%s501 + $0x18] sm:$0xff] %v500
  %v506 = vmul.f32 %v29, %v497
  %v507 = vmul.f32 %v31, %v498
  %v508 = vmul.f32 %v33, %v499
  %v509 = vmul.f32 %v35, %v500
  %v510 = vadd.f32 %v16, %v506
  %v511 = vadd.f32 %v17, %v507
  %v512 = vadd.f32 %v18, %v508
  %v513 = vadd.f32 %v19, %v509
  %s514 = scalar_lea.vmem %s3, 32
  %515 = vst [vmem:[%s514] sm:$0xff] %v510
  %516 = vst [vmem:[%s514 + $0x8] sm:$0xff] %v511
  %517 = vst [vmem:[%s514 + $0x10] sm:$0xff] %v512
  %518 = vst [vmem:[%s514 + $0x18] sm:$0xff] %v513
  %s519 = scalar_lea.vmem %s0, 64
  %v520 = vld [vmem:[%s519] sm:$0xff]
  %v521 = vld [vmem:[%s519 + $0x8] sm:$0xff]
  %v522 = vld [vmem:[%s519 + $0x10] sm:$0xff]
  %v523 = vld [vmem:[%s519 + $0x18] sm:$0xff]
  %v524 = vand.u32 %v520, 8388607
  %v525 = vand.u32 %v521, 8388607
  %v526 = vand.u32 %v522, 8388607
  %v527 = vand.u32 %v523, 8388607
  %v528 = vcvt.s32.f32 %v524
  %v529 = vcvt.s32.f32 %v525
  %v530 = vcvt.s32.f32 %v526
  %v531 = vcvt.s32.f32 %v527
  %v532 = vmul.f32 %v528, 2.3841858e-07
  %v533 = vmul.f32 %v529, 2.3841858e-07
  %v534 = vmul.f32 %v530, 2.3841858e-07
  %v535 = vmul.f32 %v531, 2.3841858e-07
  %v536 = vadd.f32 %v532, -0.9999999
  %v537 = vadd.f32 %v533, -0.9999999
  %v538 = vadd.f32 %v534, -0.9999999
  %v539 = vadd.f32 %v535, -0.9999999
  %v540 = vsub.f32 1.0, %v536
  %v541 = vsub.f32 1.0, %v537
  %v542 = vsub.f32 1.0, %v538
  %v543 = vsub.f32 1.0, %v539
  %v544 = vadd.f32 %v536, 1.0
  %v545 = vadd.f32 %v537, 1.0
  %v546 = vadd.f32 %v538, 1.0
  %v547 = vadd.f32 %v539, 1.0
  %v548 = vmul.f32 %v540, %v544
  %v549 = vmul.f32 %v541, %v545
  %v550 = vmul.f32 %v542, %v546
  %v551 = vmul.f32 %v543, %v547
  %v552 = vlog2.pop %v548
  %v553 = vmul.f32 %v552, 0.6931472
  %v554 = vlog2.pop %v549
  %v555 = vmul.f32 %v554, 0.6931472
  %v556 = vlog2.pop %v550
  %v557 = vmul.f32 %v556, 0.6931472
  %v558 = vlog2.pop %v551
  %v559 = vmul.f32 %v558, 0.6931472
  %v560 = vsub.f32 0.0, %v553
  %v561 = vsub.f32 0.0, %v555
  %v562 = vsub.f32 0.0, %v557
  %v563 = vsub.f32 0.0, %v559
  %v564 = vsub.f32 %v560, 2.5
  %v565 = vsub.f32 %v561, 2.5
  %v566 = vsub.f32 %v562, 2.5
  %v567 = vsub.f32 %v563, 2.5
  %v568 = vmul.f32 %v564, 2.8102264e-08
  %v569 = vmul.f32 %v565, 2.8102264e-08
  %v570 = vmul.f32 %v566, 2.8102264e-08
  %v571 = vmul.f32 %v567, 2.8102264e-08
  %v572 = vadd.f32 %v568, 3.4327394e-07
  %v573 = vadd.f32 %v569, 3.4327394e-07
  %v574 = vadd.f32 %v570, 3.4327394e-07
  %v575 = vadd.f32 %v571, 3.4327394e-07
  %v576 = vmul.f32 %v572, %v564
  %v577 = vmul.f32 %v573, %v565
  %v578 = vmul.f32 %v574, %v566
  %v579 = vmul.f32 %v575, %v567
  %v580 = vadd.f32 %v576, -3.5233877e-06
  %v581 = vadd.f32 %v577, -3.5233877e-06
  %v582 = vadd.f32 %v578, -3.5233877e-06
  %v583 = vadd.f32 %v579, -3.5233877e-06
  %v584 = vmul.f32 %v580, %v564
  %v585 = vmul.f32 %v581, %v565
  %v586 = vmul.f32 %v582, %v566
  %v587 = vmul.f32 %v583, %v567
  %v588 = vadd.f32 %v584, -4.3915065e-06
  %v589 = vadd.f32 %v585, -4.3915065e-06
  %v590 = vadd.f32 %v586, -4.3915065e-06
  %v591 = vadd.f32 %v587, -4.3915065e-06
  %v592 = vmul.f32 %v588, %v564
  %v593 = vmul.f32 %v589, %v565
  %v594 = vmul.f32 %v590, %v566
  %v595 = vmul.f32 %v591, %v567
  %v596 = vadd.f32 %v592, 0.00021858087
  %v597 = vadd.f32 %v593, 0.00021858087
  %v598 = vadd.f32 %v594, 0.00021858087
  %v599 = vadd.f32 %v595, 0.00021858087
  %v600 = vmul.f32 %v596, %v564
  %v601 = vmul.f32 %v597, %v565
  %v602 = vmul.f32 %v598, %v566
  %v603 = vmul.f32 %v599, %v567
  %v604 = vadd.f32 %v600, -0.001253725
  %v605 = vadd.f32 %v601, -0.001253725
  %v606 = vadd.f32 %v602, -0.001253725
  %v607 = vadd.f32 %v603, -0.001253725
  %v608 = vmul.f32 %v604, %v564
  %v609 = vmul.f32 %v605, %v565
  %v610 = vmul.f32 %v606, %v566
  %v611 = vmul.f32 %v607, %v567
  %v612 = vadd.f32 %v608, -0.0041776816
  %v613 = vadd.f32 %v609, -0.0041776816
  %v614 = vadd.f32 %v610, -0.0041776816
  %v615 = vadd.f32 %v611, -0.0041776816
  %v616 = vmul.f32 %v612, %v564
  %v617 = vmul.f32 %v613, %v565
  %v618 = vmul.f32 %v614, %v566
  %v619 = vmul.f32 %v615, %v567
  %v620 = vadd.f32 %v616, 0.24664073
  %v621 = vadd.f32 %v617, 0.24664073
  %v622 = vadd.f32 %v618, 0.24664073
  %v623 = vadd.f32 %v619, 0.24664073
  %v624 = vmul.f32 %v620, %v564
  %v625 = vmul.f32 %v621, %v565
  %v626 = vmul.f32 %v622, %v566
  %v627 = vmul.f32 %v623, %v567
  %v628 = vadd.f32 %v624, 1.5014094
  %v629 = vadd.f32 %v625, 1.5014094
  %v630 = vadd.f32 %v626, 1.5014094
  %v631 = vadd.f32 %v627, 1.5014094
  %v632 = vrsqrt.pop %v560
  %v633 = vmul.f32 %v560, %v632
  %vm634 = vcmp.eq.f32.partialorder %v560, inf
  %v635 = vsel %vm634, %v560, %v633
  %vm636 = vcmp.eq.f32.partialorder %v560, 0.0
  %v637 = vand.u32 %v560, 2147483648
  %v638 = vsel %vm636, %v637, %v635
  %v639 = vrsqrt.pop %v561
  %v640 = vmul.f32 %v561, %v639
  %vm641 = vcmp.eq.f32.partialorder %v561, inf
  %v642 = vsel %vm641, %v561, %v640
  %vm643 = vcmp.eq.f32.partialorder %v561, 0.0
  %v644 = vand.u32 %v561, 2147483648
  %v645 = vsel %vm643, %v644, %v642
  %v646 = vrsqrt.pop %v562
  %v647 = vmul.f32 %v562, %v646
  %vm648 = vcmp.eq.f32.partialorder %v562, inf
  %v649 = vsel %vm648, %v562, %v647
  %vm650 = vcmp.eq.f32.partialorder %v562, 0.0
  %v651 = vand.u32 %v562, 2147483648
  %v652 = vsel %vm650, %v651, %v649
  %v653 = vrsqrt.pop %v563
  %v654 = vmul.f32 %v563, %v653
  %vm655 = vcmp.eq.f32.partialorder %v563, inf
  %v656 = vsel %vm655, %v563, %v654
  %vm657 = vcmp.eq.f32.partialorder %v563, 0.0
  %v658 = vand.u32 %v563, 2147483648
  %v659 = vsel %vm657, %v658, %v656
  %v660 = vsub.f32 %v638, 3.0
  %v661 = vsub.f32 %v645, 3.0
  %v662 = vsub.f32 %v652, 3.0
  %v663 = vsub.f32 %v659, 3.0
  %v664 = vmul.f32 %v660, -0.00020021426
  %v665 = vmul.f32 %v661, -0.00020021426
  %v666 = vmul.f32 %v662, -0.00020021426
  %v667 = vmul.f32 %v663, -0.00020021426
  %v668 = vadd.f32 %v664, 0.00010095056
  %v669 = vadd.f32 %v665, 0.00010095056
  %v670 = vadd.f32 %v666, 0.00010095056
  %v671 = vadd.f32 %v667, 0.00010095056
  %v672 = vmul.f32 %v668, %v660
  %v673 = vmul.f32 %v669, %v661
  %v674 = vmul.f32 %v670, %v662
  %v675 = vmul.f32 %v671, %v663
  %v676 = vadd.f32 %v672, 0.0013493432
  %v677 = vadd.f32 %v673, 0.0013493432
  %v678 = vadd.f32 %v674, 0.0013493432
  %v679 = vadd.f32 %v675, 0.0013493432
  %v680 = vmul.f32 %v676, %v660
  %v681 = vmul.f32 %v677, %v661
  %v682 = vmul.f32 %v678, %v662
  %v683 = vmul.f32 %v679, %v663
  %v684 = vadd.f32 %v680, -0.0036734284
  %v685 = vadd.f32 %v681, -0.0036734284
  %v686 = vadd.f32 %v682, -0.0036734284
  %v687 = vadd.f32 %v683, -0.0036734284
  %v688 = vmul.f32 %v684, %v660
  %v689 = vmul.f32 %v685, %v661
  %v690 = vmul.f32 %v686, %v662
  %v691 = vmul.f32 %v687, %v663
  %v692 = vadd.f32 %v688, 0.0057395077
  %v693 = vadd.f32 %v689, 0.0057395077
  %v694 = vadd.f32 %v690, 0.0057395077
  %v695 = vadd.f32 %v691, 0.0057395077
  %v696 = vmul.f32 %v692, %v660
  %v697 = vmul.f32 %v693, %v661
  %v698 = vmul.f32 %v694, %v662
  %v699 = vmul.f32 %v695, %v663
  %v700 = vadd.f32 %v696, -0.0076224613
  %v701 = vadd.f32 %v697, -0.0076224613
  %v702 = vadd.f32 %v698, -0.0076224613
  %v703 = vadd.f32 %v699, -0.0076224613
  %v704 = vmul.f32 %v700, %v660
  %v705 = vmul.f32 %v701, %v661
  %v706 = vmul.f32 %v702, %v662
  %v707 = vmul.f32 %v703, %v663
  %v708 = vadd.f32 %v704, 0.0094388705
  %v709 = vadd.f32 %v705, 0.0094388705
  %v710 = vadd.f32 %v706, 0.0094388705
  %v711 = vadd.f32 %v707, 0.0094388705
  %v712 = vmul.f32 %v708, %v660
  %v713 = vmul.f32 %v709, %v661
  %v714 = vmul.f32 %v710, %v662
  %v715 = vmul.f32 %v711, %v663
  %v716 = vadd.f32 %v712, 1.001674
  %v717 = vadd.f32 %v713, 1.001674
  %v718 = vadd.f32 %v714, 1.001674
  %v719 = vadd.f32 %v715, 1.001674
  %v720 = vmul.f32 %v716, %v660
  %v721 = vmul.f32 %v717, %v661
  %v722 = vmul.f32 %v718, %v662
  %v723 = vmul.f32 %v719, %v663
  %v724 = vadd.f32 %v720, 2.8329768
  %v725 = vadd.f32 %v721, 2.8329768
  %v726 = vadd.f32 %v722, 2.8329768
  %v727 = vadd.f32 %v723, 2.8329768
  %vm728 = vcmp.lt.f32.partialorder %v560, 5.0
  %vm729 = vcmp.lt.f32.partialorder %v561, 5.0
  %vm730 = vcmp.lt.f32.partialorder %v562, 5.0
  %vm731 = vcmp.lt.f32.partialorder %v563, 5.0
  %v732 = vsel %vm728, %v628, %v724
  %v733 = vsel %vm729, %v629, %v725
  %v734 = vsel %vm730, %v630, %v726
  %v735 = vsel %vm731, %v631, %v727
  %v736 = vmul.f32 %v732, %v536
  %v737 = vmul.f32 %v733, %v537
  %v738 = vmul.f32 %v734, %v538
  %v739 = vmul.f32 %v735, %v539
  %v740 = vmul.f32 %v736, 1.4142135
  %v741 = vmul.f32 %v737, 1.4142135
  %v742 = vmul.f32 %v738, 1.4142135
  %v743 = vmul.f32 %v739, 1.4142135
  %s744 = scalar_lea.vmem %s4, 64
  %745 = vst [vmem:[%s744] sm:$0xff] %v740
  %746 = vst [vmem:[%s744 + $0x8] sm:$0xff] %v741
  %747 = vst [vmem:[%s744 + $0x10] sm:$0xff] %v742
  %748 = vst [vmem:[%s744 + $0x18] sm:$0xff] %v743
  %v749 = vmul.f32 %v29, %v740
  %v750 = vmul.f32 %v31, %v741
  %v751 = vmul.f32 %v33, %v742
  %v752 = vmul.f32 %v35, %v743
  %v753 = vadd.f32 %v16, %v749
  %v754 = vadd.f32 %v17, %v750
  %v755 = vadd.f32 %v18, %v751
  %v756 = vadd.f32 %v19, %v752
  %s757 = scalar_lea.vmem %s3, 64
  %758 = vst [vmem:[%s757] sm:$0xff] %v753
  %759 = vst [vmem:[%s757 + $0x8] sm:$0xff] %v754
  %760 = vst [vmem:[%s757 + $0x10] sm:$0xff] %v755
  %761 = vst [vmem:[%s757 + $0x18] sm:$0xff] %v756
  %s762 = scalar_lea.vmem %s0, 96
  %v763 = vld [vmem:[%s762] sm:$0xff]
  %v764 = vld [vmem:[%s762 + $0x8] sm:$0xff]
  %v765 = vld [vmem:[%s762 + $0x10] sm:$0xff]
  %v766 = vld [vmem:[%s762 + $0x18] sm:$0xff]
  %v767 = vand.u32 %v763, 8388607
  %v768 = vand.u32 %v764, 8388607
  %v769 = vand.u32 %v765, 8388607
  %v770 = vand.u32 %v766, 8388607
  %v771 = vcvt.s32.f32 %v767
  %v772 = vcvt.s32.f32 %v768
  %v773 = vcvt.s32.f32 %v769
  %v774 = vcvt.s32.f32 %v770
  %v775 = vmul.f32 %v771, 2.3841858e-07
  %v776 = vmul.f32 %v772, 2.3841858e-07
  %v777 = vmul.f32 %v773, 2.3841858e-07
  %v778 = vmul.f32 %v774, 2.3841858e-07
  %v779 = vadd.f32 %v775, -0.9999999
  %v780 = vadd.f32 %v776, -0.9999999
  %v781 = vadd.f32 %v777, -0.9999999
  %v782 = vadd.f32 %v778, -0.9999999
  %v783 = vsub.f32 1.0, %v779
  %v784 = vsub.f32 1.0, %v780
  %v785 = vsub.f32 1.0, %v781
  %v786 = vsub.f32 1.0, %v782
  %v787 = vadd.f32 %v779, 1.0
  %v788 = vadd.f32 %v780, 1.0
  %v789 = vadd.f32 %v781, 1.0
  %v790 = vadd.f32 %v782, 1.0
  %v791 = vmul.f32 %v783, %v787
  %v792 = vmul.f32 %v784, %v788
  %v793 = vmul.f32 %v785, %v789
  %v794 = vmul.f32 %v786, %v790
  %v795 = vlog2.pop %v791
  %v796 = vmul.f32 %v795, 0.6931472
  %v797 = vlog2.pop %v792
  %v798 = vmul.f32 %v797, 0.6931472
  %v799 = vlog2.pop %v793
  %v800 = vmul.f32 %v799, 0.6931472
  %v801 = vlog2.pop %v794
  %v802 = vmul.f32 %v801, 0.6931472
  %v803 = vsub.f32 0.0, %v796
  %v804 = vsub.f32 0.0, %v798
  %v805 = vsub.f32 0.0, %v800
  %v806 = vsub.f32 0.0, %v802
  %v807 = vsub.f32 %v803, 2.5
  %v808 = vsub.f32 %v804, 2.5
  %v809 = vsub.f32 %v805, 2.5
  %v810 = vsub.f32 %v806, 2.5
  %v811 = vmul.f32 %v807, 2.8102264e-08
  %v812 = vmul.f32 %v808, 2.8102264e-08
  %v813 = vmul.f32 %v809, 2.8102264e-08
  %v814 = vmul.f32 %v810, 2.8102264e-08
  %v815 = vadd.f32 %v811, 3.4327394e-07
  %v816 = vadd.f32 %v812, 3.4327394e-07
  %v817 = vadd.f32 %v813, 3.4327394e-07
  %v818 = vadd.f32 %v814, 3.4327394e-07
  %v819 = vmul.f32 %v815, %v807
  %v820 = vmul.f32 %v816, %v808
  %v821 = vmul.f32 %v817, %v809
  %v822 = vmul.f32 %v818, %v810
  %v823 = vadd.f32 %v819, -3.5233877e-06
  %v824 = vadd.f32 %v820, -3.5233877e-06
  %v825 = vadd.f32 %v821, -3.5233877e-06
  %v826 = vadd.f32 %v822, -3.5233877e-06
  %v827 = vmul.f32 %v823, %v807
  %v828 = vmul.f32 %v824, %v808
  %v829 = vmul.f32 %v825, %v809
  %v830 = vmul.f32 %v826, %v810
  %v831 = vadd.f32 %v827, -4.3915065e-06
  %v832 = vadd.f32 %v828, -4.3915065e-06
  %v833 = vadd.f32 %v829, -4.3915065e-06
  %v834 = vadd.f32 %v830, -4.3915065e-06
  %v835 = vmul.f32 %v831, %v807
  %v836 = vmul.f32 %v832, %v808
  %v837 = vmul.f32 %v833, %v809
  %v838 = vmul.f32 %v834, %v810
  %v839 = vadd.f32 %v835, 0.00021858087
  %v840 = vadd.f32 %v836, 0.00021858087
  %v841 = vadd.f32 %v837, 0.00021858087
  %v842 = vadd.f32 %v838, 0.00021858087
  %v843 = vmul.f32 %v839, %v807
  %v844 = vmul.f32 %v840, %v808
  %v845 = vmul.f32 %v841, %v809
  %v846 = vmul.f32 %v842, %v810
  %v847 = vadd.f32 %v843, -0.001253725
  %v848 = vadd.f32 %v844, -0.001253725
  %v849 = vadd.f32 %v845, -0.001253725
  %v850 = vadd.f32 %v846, -0.001253725
  %v851 = vmul.f32 %v847, %v807
  %v852 = vmul.f32 %v848, %v808
  %v853 = vmul.f32 %v849, %v809
  %v854 = vmul.f32 %v850, %v810
  %v855 = vadd.f32 %v851, -0.0041776816
  %v856 = vadd.f32 %v852, -0.0041776816
  %v857 = vadd.f32 %v853, -0.0041776816
  %v858 = vadd.f32 %v854, -0.0041776816
  %v859 = vmul.f32 %v855, %v807
  %v860 = vmul.f32 %v856, %v808
  %v861 = vmul.f32 %v857, %v809
  %v862 = vmul.f32 %v858, %v810
  %v863 = vadd.f32 %v859, 0.24664073
  %v864 = vadd.f32 %v860, 0.24664073
  %v865 = vadd.f32 %v861, 0.24664073
  %v866 = vadd.f32 %v862, 0.24664073
  %v867 = vmul.f32 %v863, %v807
  %v868 = vmul.f32 %v864, %v808
  %v869 = vmul.f32 %v865, %v809
  %v870 = vmul.f32 %v866, %v810
  %v871 = vadd.f32 %v867, 1.5014094
  %v872 = vadd.f32 %v868, 1.5014094
  %v873 = vadd.f32 %v869, 1.5014094
  %v874 = vadd.f32 %v870, 1.5014094
  %v875 = vrsqrt.pop %v803
  %v876 = vmul.f32 %v803, %v875
  %vm877 = vcmp.eq.f32.partialorder %v803, inf
  %v878 = vsel %vm877, %v803, %v876
  %vm879 = vcmp.eq.f32.partialorder %v803, 0.0
  %v880 = vand.u32 %v803, 2147483648
  %v881 = vsel %vm879, %v880, %v878
  %v882 = vrsqrt.pop %v804
  %v883 = vmul.f32 %v804, %v882
  %vm884 = vcmp.eq.f32.partialorder %v804, inf
  %v885 = vsel %vm884, %v804, %v883
  %vm886 = vcmp.eq.f32.partialorder %v804, 0.0
  %v887 = vand.u32 %v804, 2147483648
  %v888 = vsel %vm886, %v887, %v885
  %v889 = vrsqrt.pop %v805
  %v890 = vmul.f32 %v805, %v889
  %vm891 = vcmp.eq.f32.partialorder %v805, inf
  %v892 = vsel %vm891, %v805, %v890
  %vm893 = vcmp.eq.f32.partialorder %v805, 0.0
  %v894 = vand.u32 %v805, 2147483648
  %v895 = vsel %vm893, %v894, %v892
  %v896 = vrsqrt.pop %v806
  %v897 = vmul.f32 %v806, %v896
  %vm898 = vcmp.eq.f32.partialorder %v806, inf
  %v899 = vsel %vm898, %v806, %v897
  %vm900 = vcmp.eq.f32.partialorder %v806, 0.0
  %v901 = vand.u32 %v806, 2147483648
  %v902 = vsel %vm900, %v901, %v899
  %v903 = vsub.f32 %v881, 3.0
  %v904 = vsub.f32 %v888, 3.0
  %v905 = vsub.f32 %v895, 3.0
  %v906 = vsub.f32 %v902, 3.0
  %v907 = vmul.f32 %v903, -0.00020021426
  %v908 = vmul.f32 %v904, -0.00020021426
  %v909 = vmul.f32 %v905, -0.00020021426
  %v910 = vmul.f32 %v906, -0.00020021426
  %v911 = vadd.f32 %v907, 0.00010095056
  %v912 = vadd.f32 %v908, 0.00010095056
  %v913 = vadd.f32 %v909, 0.00010095056
  %v914 = vadd.f32 %v910, 0.00010095056
  %v915 = vmul.f32 %v911, %v903
  %v916 = vmul.f32 %v912, %v904
  %v917 = vmul.f32 %v913, %v905
  %v918 = vmul.f32 %v914, %v906
  %v919 = vadd.f32 %v915, 0.0013493432
  %v920 = vadd.f32 %v916, 0.0013493432
  %v921 = vadd.f32 %v917, 0.0013493432
  %v922 = vadd.f32 %v918, 0.0013493432
  %v923 = vmul.f32 %v919, %v903
  %v924 = vmul.f32 %v920, %v904
  %v925 = vmul.f32 %v921, %v905
  %v926 = vmul.f32 %v922, %v906
  %v927 = vadd.f32 %v923, -0.0036734284
  %v928 = vadd.f32 %v924, -0.0036734284
  %v929 = vadd.f32 %v925, -0.0036734284
  %v930 = vadd.f32 %v926, -0.0036734284
  %v931 = vmul.f32 %v927, %v903
  %v932 = vmul.f32 %v928, %v904
  %v933 = vmul.f32 %v929, %v905
  %v934 = vmul.f32 %v930, %v906
  %v935 = vadd.f32 %v931, 0.0057395077
  %v936 = vadd.f32 %v932, 0.0057395077
  %v937 = vadd.f32 %v933, 0.0057395077
  %v938 = vadd.f32 %v934, 0.0057395077
  %v939 = vmul.f32 %v935, %v903
  %v940 = vmul.f32 %v936, %v904
  %v941 = vmul.f32 %v937, %v905
  %v942 = vmul.f32 %v938, %v906
  %v943 = vadd.f32 %v939, -0.0076224613
  %v944 = vadd.f32 %v940, -0.0076224613
  %v945 = vadd.f32 %v941, -0.0076224613
  %v946 = vadd.f32 %v942, -0.0076224613
  %v947 = vmul.f32 %v943, %v903
  %v948 = vmul.f32 %v944, %v904
  %v949 = vmul.f32 %v945, %v905
  %v950 = vmul.f32 %v946, %v906
  %v951 = vadd.f32 %v947, 0.0094388705
  %v952 = vadd.f32 %v948, 0.0094388705
  %v953 = vadd.f32 %v949, 0.0094388705
  %v954 = vadd.f32 %v950, 0.0094388705
  %v955 = vmul.f32 %v951, %v903
  %v956 = vmul.f32 %v952, %v904
  %v957 = vmul.f32 %v953, %v905
  %v958 = vmul.f32 %v954, %v906
  %v959 = vadd.f32 %v955, 1.001674
  %v960 = vadd.f32 %v956, 1.001674
  %v961 = vadd.f32 %v957, 1.001674
  %v962 = vadd.f32 %v958, 1.001674
  %v963 = vmul.f32 %v959, %v903
  %v964 = vmul.f32 %v960, %v904
  %v965 = vmul.f32 %v961, %v905
  %v966 = vmul.f32 %v962, %v906
  %v967 = vadd.f32 %v963, 2.8329768
  %v968 = vadd.f32 %v964, 2.8329768
  %v969 = vadd.f32 %v965, 2.8329768
  %v970 = vadd.f32 %v966, 2.8329768
  %vm971 = vcmp.lt.f32.partialorder %v803, 5.0
  %vm972 = vcmp.lt.f32.partialorder %v804, 5.0
  %vm973 = vcmp.lt.f32.partialorder %v805, 5.0
  %vm974 = vcmp.lt.f32.partialorder %v806, 5.0
  %v975 = vsel %vm971, %v871, %v967
  %v976 = vsel %vm972, %v872, %v968
  %v977 = vsel %vm973, %v873, %v969
  %v978 = vsel %vm974, %v874, %v970
  %v979 = vmul.f32 %v975, %v779
  %v980 = vmul.f32 %v976, %v780
  %v981 = vmul.f32 %v977, %v781
  %v982 = vmul.f32 %v978, %v782
  %v983 = vmul.f32 %v979, 1.4142135
  %v984 = vmul.f32 %v980, 1.4142135
  %v985 = vmul.f32 %v981, 1.4142135
  %v986 = vmul.f32 %v982, 1.4142135
  %s987 = scalar_lea.vmem %s4, 96
  %988 = vst [vmem:[%s987] sm:$0xff] %v983
  %989 = vst [vmem:[%s987 + $0x8] sm:$0xff] %v984
  %990 = vst [vmem:[%s987 + $0x10] sm:$0xff] %v985
  %991 = vst [vmem:[%s987 + $0x18] sm:$0xff] %v986
  %v992 = vmul.f32 %v29, %v983
  %v993 = vmul.f32 %v31, %v984
  %v994 = vmul.f32 %v33, %v985
  %v995 = vmul.f32 %v35, %v986
  %v996 = vadd.f32 %v16, %v992
  %v997 = vadd.f32 %v17, %v993
  %v998 = vadd.f32 %v18, %v994
  %v999 = vadd.f32 %v19, %v995
  %s1000 = scalar_lea.vmem %s3, 96
  %1001 = vst [vmem:[%s1000] sm:$0xff] %v996
  %1002 = vst [vmem:[%s1000 + $0x8] sm:$0xff] %v997
  %1003 = vst [vmem:[%s1000 + $0x10] sm:$0xff] %v998
  %1004 = vst [vmem:[%s1000 + $0x18] sm:$0xff] %v999
  %s1005 = scalar_lea.vmem %s0, 128
  %v1006 = vld [vmem:[%s1005] sm:$0xff]
  %v1007 = vld [vmem:[%s1005 + $0x8] sm:$0xff]
  %v1008 = vld [vmem:[%s1005 + $0x10] sm:$0xff]
  %v1009 = vld [vmem:[%s1005 + $0x18] sm:$0xff]
  %v1010 = vand.u32 %v1006, 8388607
  %v1011 = vand.u32 %v1007, 8388607
  %v1012 = vand.u32 %v1008, 8388607
  %v1013 = vand.u32 %v1009, 8388607
  %v1014 = vcvt.s32.f32 %v1010
  %v1015 = vcvt.s32.f32 %v1011
  %v1016 = vcvt.s32.f32 %v1012
  %v1017 = vcvt.s32.f32 %v1013
  %v1018 = vmul.f32 %v1014, 2.3841858e-07
  %v1019 = vmul.f32 %v1015, 2.3841858e-07
  %v1020 = vmul.f32 %v1016, 2.3841858e-07
  %v1021 = vmul.f32 %v1017, 2.3841858e-07
  %v1022 = vadd.f32 %v1018, -0.9999999
  %v1023 = vadd.f32 %v1019, -0.9999999
  %v1024 = vadd.f32 %v1020, -0.9999999
  %v1025 = vadd.f32 %v1021, -0.9999999
  %v1026 = vsub.f32 1.0, %v1022
  %v1027 = vsub.f32 1.0, %v1023
  %v1028 = vsub.f32 1.0, %v1024
  %v1029 = vsub.f32 1.0, %v1025
  %v1030 = vadd.f32 %v1022, 1.0
  %v1031 = vadd.f32 %v1023, 1.0
  %v1032 = vadd.f32 %v1024, 1.0
  %v1033 = vadd.f32 %v1025, 1.0
  %v1034 = vmul.f32 %v1026, %v1030
  %v1035 = vmul.f32 %v1027, %v1031
  %v1036 = vmul.f32 %v1028, %v1032
  %v1037 = vmul.f32 %v1029, %v1033
  %v1038 = vlog2.pop %v1034
  %v1039 = vmul.f32 %v1038, 0.6931472
  %v1040 = vlog2.pop %v1035
  %v1041 = vmul.f32 %v1040, 0.6931472
  %v1042 = vlog2.pop %v1036
  %v1043 = vmul.f32 %v1042, 0.6931472
  %v1044 = vlog2.pop %v1037
  %v1045 = vmul.f32 %v1044, 0.6931472
  %v1046 = vsub.f32 0.0, %v1039
  %v1047 = vsub.f32 0.0, %v1041
  %v1048 = vsub.f32 0.0, %v1043
  %v1049 = vsub.f32 0.0, %v1045
  %v1050 = vsub.f32 %v1046, 2.5
  %v1051 = vsub.f32 %v1047, 2.5
  %v1052 = vsub.f32 %v1048, 2.5
  %v1053 = vsub.f32 %v1049, 2.5
  %v1054 = vmul.f32 %v1050, 2.8102264e-08
  %v1055 = vmul.f32 %v1051, 2.8102264e-08
  %v1056 = vmul.f32 %v1052, 2.8102264e-08
  %v1057 = vmul.f32 %v1053, 2.8102264e-08
  %v1058 = vadd.f32 %v1054, 3.4327394e-07
  %v1059 = vadd.f32 %v1055, 3.4327394e-07
  %v1060 = vadd.f32 %v1056, 3.4327394e-07
  %v1061 = vadd.f32 %v1057, 3.4327394e-07
  %v1062 = vmul.f32 %v1058, %v1050
  %v1063 = vmul.f32 %v1059, %v1051
  %v1064 = vmul.f32 %v1060, %v1052
  %v1065 = vmul.f32 %v1061, %v1053
  %v1066 = vadd.f32 %v1062, -3.5233877e-06
  %v1067 = vadd.f32 %v1063, -3.5233877e-06
  %v1068 = vadd.f32 %v1064, -3.5233877e-06
  %v1069 = vadd.f32 %v1065, -3.5233877e-06
  %v1070 = vmul.f32 %v1066, %v1050
  %v1071 = vmul.f32 %v1067, %v1051
  %v1072 = vmul.f32 %v1068, %v1052
  %v1073 = vmul.f32 %v1069, %v1053
  %v1074 = vadd.f32 %v1070, -4.3915065e-06
  %v1075 = vadd.f32 %v1071, -4.3915065e-06
  %v1076 = vadd.f32 %v1072, -4.3915065e-06
  %v1077 = vadd.f32 %v1073, -4.3915065e-06
  %v1078 = vmul.f32 %v1074, %v1050
  %v1079 = vmul.f32 %v1075, %v1051
  %v1080 = vmul.f32 %v1076, %v1052
  %v1081 = vmul.f32 %v1077, %v1053
  %v1082 = vadd.f32 %v1078, 0.00021858087
  %v1083 = vadd.f32 %v1079, 0.00021858087
  %v1084 = vadd.f32 %v1080, 0.00021858087
  %v1085 = vadd.f32 %v1081, 0.00021858087
  %v1086 = vmul.f32 %v1082, %v1050
  %v1087 = vmul.f32 %v1083, %v1051
  %v1088 = vmul.f32 %v1084, %v1052
  %v1089 = vmul.f32 %v1085, %v1053
  %v1090 = vadd.f32 %v1086, -0.001253725
  %v1091 = vadd.f32 %v1087, -0.001253725
  %v1092 = vadd.f32 %v1088, -0.001253725
  %v1093 = vadd.f32 %v1089, -0.001253725
  %v1094 = vmul.f32 %v1090, %v1050
  %v1095 = vmul.f32 %v1091, %v1051
  %v1096 = vmul.f32 %v1092, %v1052
  %v1097 = vmul.f32 %v1093, %v1053
  %v1098 = vadd.f32 %v1094, -0.0041776816
  %v1099 = vadd.f32 %v1095, -0.0041776816
  %v1100 = vadd.f32 %v1096, -0.0041776816
  %v1101 = vadd.f32 %v1097, -0.0041776816
  %v1102 = vmul.f32 %v1098, %v1050
  %v1103 = vmul.f32 %v1099, %v1051
  %v1104 = vmul.f32 %v1100, %v1052
  %v1105 = vmul.f32 %v1101, %v1053
  %v1106 = vadd.f32 %v1102, 0.24664073
  %v1107 = vadd.f32 %v1103, 0.24664073
  %v1108 = vadd.f32 %v1104, 0.24664073
  %v1109 = vadd.f32 %v1105, 0.24664073
  %v1110 = vmul.f32 %v1106, %v1050
  %v1111 = vmul.f32 %v1107, %v1051
  %v1112 = vmul.f32 %v1108, %v1052
  %v1113 = vmul.f32 %v1109, %v1053
  %v1114 = vadd.f32 %v1110, 1.5014094
  %v1115 = vadd.f32 %v1111, 1.5014094
  %v1116 = vadd.f32 %v1112, 1.5014094
  %v1117 = vadd.f32 %v1113, 1.5014094
  %v1118 = vrsqrt.pop %v1046
  %v1119 = vmul.f32 %v1046, %v1118
  %vm1120 = vcmp.eq.f32.partialorder %v1046, inf
  %v1121 = vsel %vm1120, %v1046, %v1119
  %vm1122 = vcmp.eq.f32.partialorder %v1046, 0.0
  %v1123 = vand.u32 %v1046, 2147483648
  %v1124 = vsel %vm1122, %v1123, %v1121
  %v1125 = vrsqrt.pop %v1047
  %v1126 = vmul.f32 %v1047, %v1125
  %vm1127 = vcmp.eq.f32.partialorder %v1047, inf
  %v1128 = vsel %vm1127, %v1047, %v1126
  %vm1129 = vcmp.eq.f32.partialorder %v1047, 0.0
  %v1130 = vand.u32 %v1047, 2147483648
  %v1131 = vsel %vm1129, %v1130, %v1128
  %v1132 = vrsqrt.pop %v1048
  %v1133 = vmul.f32 %v1048, %v1132
  %vm1134 = vcmp.eq.f32.partialorder %v1048, inf
  %v1135 = vsel %vm1134, %v1048, %v1133
  %vm1136 = vcmp.eq.f32.partialorder %v1048, 0.0
  %v1137 = vand.u32 %v1048, 2147483648
  %v1138 = vsel %vm1136, %v1137, %v1135
  %v1139 = vrsqrt.pop %v1049
  %v1140 = vmul.f32 %v1049, %v1139
  %vm1141 = vcmp.eq.f32.partialorder %v1049, inf
  %v1142 = vsel %vm1141, %v1049, %v1140
  %vm1143 = vcmp.eq.f32.partialorder %v1049, 0.0
  %v1144 = vand.u32 %v1049, 2147483648
  %v1145 = vsel %vm1143, %v1144, %v1142
  %v1146 = vsub.f32 %v1124, 3.0
  %v1147 = vsub.f32 %v1131, 3.0
  %v1148 = vsub.f32 %v1138, 3.0
  %v1149 = vsub.f32 %v1145, 3.0
  %v1150 = vmul.f32 %v1146, -0.00020021426
  %v1151 = vmul.f32 %v1147, -0.00020021426
  %v1152 = vmul.f32 %v1148, -0.00020021426
  %v1153 = vmul.f32 %v1149, -0.00020021426
  %v1154 = vadd.f32 %v1150, 0.00010095056
  %v1155 = vadd.f32 %v1151, 0.00010095056
  %v1156 = vadd.f32 %v1152, 0.00010095056
  %v1157 = vadd.f32 %v1153, 0.00010095056
  %v1158 = vmul.f32 %v1154, %v1146
  %v1159 = vmul.f32 %v1155, %v1147
  %v1160 = vmul.f32 %v1156, %v1148
  %v1161 = vmul.f32 %v1157, %v1149
  %v1162 = vadd.f32 %v1158, 0.0013493432
  %v1163 = vadd.f32 %v1159, 0.0013493432
  %v1164 = vadd.f32 %v1160, 0.0013493432
  %v1165 = vadd.f32 %v1161, 0.0013493432
  %v1166 = vmul.f32 %v1162, %v1146
  %v1167 = vmul.f32 %v1163, %v1147
  %v1168 = vmul.f32 %v1164, %v1148
  %v1169 = vmul.f32 %v1165, %v1149
  %v1170 = vadd.f32 %v1166, -0.0036734284
  %v1171 = vadd.f32 %v1167, -0.0036734284
  %v1172 = vadd.f32 %v1168, -0.0036734284
  %v1173 = vadd.f32 %v1169, -0.0036734284
  %v1174 = vmul.f32 %v1170, %v1146
  %v1175 = vmul.f32 %v1171, %v1147
  %v1176 = vmul.f32 %v1172, %v1148
  %v1177 = vmul.f32 %v1173, %v1149
  %v1178 = vadd.f32 %v1174, 0.0057395077
  %v1179 = vadd.f32 %v1175, 0.0057395077
  %v1180 = vadd.f32 %v1176, 0.0057395077
  %v1181 = vadd.f32 %v1177, 0.0057395077
  %v1182 = vmul.f32 %v1178, %v1146
  %v1183 = vmul.f32 %v1179, %v1147
  %v1184 = vmul.f32 %v1180, %v1148
  %v1185 = vmul.f32 %v1181, %v1149
  %v1186 = vadd.f32 %v1182, -0.0076224613
  %v1187 = vadd.f32 %v1183, -0.0076224613
  %v1188 = vadd.f32 %v1184, -0.0076224613
  %v1189 = vadd.f32 %v1185, -0.0076224613
  %v1190 = vmul.f32 %v1186, %v1146
  %v1191 = vmul.f32 %v1187, %v1147
  %v1192 = vmul.f32 %v1188, %v1148
  %v1193 = vmul.f32 %v1189, %v1149
  %v1194 = vadd.f32 %v1190, 0.0094388705
  %v1195 = vadd.f32 %v1191, 0.0094388705
  %v1196 = vadd.f32 %v1192, 0.0094388705
  %v1197 = vadd.f32 %v1193, 0.0094388705
  %v1198 = vmul.f32 %v1194, %v1146
  %v1199 = vmul.f32 %v1195, %v1147
  %v1200 = vmul.f32 %v1196, %v1148
  %v1201 = vmul.f32 %v1197, %v1149
  %v1202 = vadd.f32 %v1198, 1.001674
  %v1203 = vadd.f32 %v1199, 1.001674
  %v1204 = vadd.f32 %v1200, 1.001674
  %v1205 = vadd.f32 %v1201, 1.001674
  %v1206 = vmul.f32 %v1202, %v1146
  %v1207 = vmul.f32 %v1203, %v1147
  %v1208 = vmul.f32 %v1204, %v1148
  %v1209 = vmul.f32 %v1205, %v1149
  %v1210 = vadd.f32 %v1206, 2.8329768
  %v1211 = vadd.f32 %v1207, 2.8329768
  %v1212 = vadd.f32 %v1208, 2.8329768
  %v1213 = vadd.f32 %v1209, 2.8329768
  %vm1214 = vcmp.lt.f32.partialorder %v1046, 5.0
  %vm1215 = vcmp.lt.f32.partialorder %v1047, 5.0
  %vm1216 = vcmp.lt.f32.partialorder %v1048, 5.0
  %vm1217 = vcmp.lt.f32.partialorder %v1049, 5.0
  %v1218 = vsel %vm1214, %v1114, %v1210
  %v1219 = vsel %vm1215, %v1115, %v1211
  %v1220 = vsel %vm1216, %v1116, %v1212
  %v1221 = vsel %vm1217, %v1117, %v1213
  %v1222 = vmul.f32 %v1218, %v1022
  %v1223 = vmul.f32 %v1219, %v1023
  %v1224 = vmul.f32 %v1220, %v1024
  %v1225 = vmul.f32 %v1221, %v1025
  %v1226 = vmul.f32 %v1222, 1.4142135
  %v1227 = vmul.f32 %v1223, 1.4142135
  %v1228 = vmul.f32 %v1224, 1.4142135
  %v1229 = vmul.f32 %v1225, 1.4142135
  %s1230 = scalar_lea.vmem %s4, 128
  %1231 = vst [vmem:[%s1230] sm:$0xff] %v1226
  %1232 = vst [vmem:[%s1230 + $0x8] sm:$0xff] %v1227
  %1233 = vst [vmem:[%s1230 + $0x10] sm:$0xff] %v1228
  %1234 = vst [vmem:[%s1230 + $0x18] sm:$0xff] %v1229
  %v1235 = vmul.f32 %v29, %v1226
  %v1236 = vmul.f32 %v31, %v1227
  %v1237 = vmul.f32 %v33, %v1228
  %v1238 = vmul.f32 %v35, %v1229
  %v1239 = vadd.f32 %v16, %v1235
  %v1240 = vadd.f32 %v17, %v1236
  %v1241 = vadd.f32 %v18, %v1237
  %v1242 = vadd.f32 %v19, %v1238
  %s1243 = scalar_lea.vmem %s3, 128
  %1244 = vst [vmem:[%s1243] sm:$0xff] %v1239
  %1245 = vst [vmem:[%s1243 + $0x8] sm:$0xff] %v1240
  %1246 = vst [vmem:[%s1243 + $0x10] sm:$0xff] %v1241
  %1247 = vst [vmem:[%s1243 + $0x18] sm:$0xff] %v1242
  // Predicated region
  $region14: #{reparametrize_iw.1} parent=0 // pred_check
    _
  $region15: #{reparametrize_iw.1} parent=0 // pred_check_branch
    %1249 = sbr.rel (0) target = $region17
  $region16: #{reparametrize_iw.1} parent=0 // pred_region
    _
  $region17: #{reparametrize_iw.1} parent=0 // pred_fallthru
    _
  // Predicated region
  $region18: #{reparametrize_iw.1} parent=0 // pred_check
    _
  $region19: #{reparametrize_iw.1} parent=0 // pred_check_branch
    %1251 = sbr.rel (0) target = $region21
  $region20: #{reparametrize_iw.1} parent=0 // pred_region
    _
  $region21: #{reparametrize_iw.1} parent=0 // pred_fallthru
    _
  // Predicated region
  $region22: #{reparametrize_iw.1} parent=0 // pred_check
    _
  $region23: #{reparametrize_iw.1} parent=0 // pred_check_branch
    %1253 = sbr.rel (0) target = $region25
  $region24: #{reparametrize_iw.1} parent=0 // pred_region
    _
  $region25: #{reparametrize_iw.1} parent=0 // pred_fallthru
    _
  // Predicated region
  $region26: #{reparametrize_iw.1} parent=0 // pred_check
    _
  $region27: #{reparametrize_iw.1} parent=0 // pred_check_branch
    %1255 = sbr.rel (0) target = $region29
  $region28: #{reparametrize_iw.1} parent=0 // pred_region
    _
  $region29: #{reparametrize_iw.1} parent=0 // pred_fallthru
    _

</llo_original>
